<compile_context>
chip_gen: v6e
topology: v6e:2x2x1
jax: 0.10.0
libtpu: 0.0.40
codegen_flags: <defaults>
</compile_context>

<pallas_src>
import functools

import jax
import jax.numpy as jnp
from jax import lax
from jax.experimental import pallas as pl
from jax.experimental.pallas import tpu as pltpu

# --- MultiBoxLoss config (matches the PyTorch module __init__ defaults) -----
NUM_CLASSES = 4
OVERLAP_THRESH = 0.5
NEGPOS_RATIO = 3
VARIANCE = (0.1, 0.2)   # cfg['variance']


def _first_argmax(vals, axis):
    """argmax returning the first maximal index (Mosaic-safe), keepdims=True."""
    m = jnp.max(vals, axis=axis, keepdims=True)
    n = vals.shape[axis]
    ishape = tuple(d if a == axis else 1 for a, d in enumerate(vals.shape))
    idx = lax.broadcasted_iota(jnp.int32, ishape, axis)
    cand = jnp.where(vals == m, idx, n)
    return jnp.min(cand, axis=axis, keepdims=True)


def multibox_loss_kernel(loc_ref, conf_ref, priors_ref, truths_ref, labels_ref,
                         out_ref, *, num_valid, rank_chunk):
    # loc_ref    [4, TB, P]   (coordinate-major -> full (TB,P) vreg slabs)
    # conf_ref   [C, TB, P]   (class-major      -> full (TB,P) vreg slabs)
    # priors_ref [4, P]
    # truths_ref [TB, NOBJ, 4]
    # labels_ref [TB, NOBJ, 1]  int32
    # out_ref    [TB, 1, 128]   per-image [loss_l, loss_c, num_pos, 0...]
    C = conf_ref.shape[0]
    _, TB, P = loc_ref.shape
    NOBJ = truths_ref.shape[1]
    var0, var1 = VARIANCE

    # ---------------- point_form(priors), shared across the batch block ------
    pr_cx = priors_ref[0:1, :]          # [1, P] -> broadcasts over TB / NOBJ
    pr_cy = priors_ref[1:2, :]
    pr_w = priors_ref[2:3, :]
    pr_h = priors_ref[3:4, :]
    px1 = pr_cx - pr_w * 0.5
    py1 = pr_cy - pr_h * 0.5
    px2 = pr_cx + pr_w * 0.5
    py2 = pr_cy + pr_h * 0.5

    # ---------------- jaccard overlaps [TB, NOBJ, P] -------------------------
    truths = truths_ref[...]            # [TB, NOBJ, 4]
    tx1 = truths[:, :, 0:1]             # [TB, NOBJ, 1]
    ty1 = truths[:, :, 1:2]
    tx2 = truths[:, :, 2:3]
    ty2 = truths[:, :, 3:4]

    iw = jnp.maximum(jnp.minimum(tx2, px2) - jnp.maximum(tx1, px1), 0.0)
    ih = jnp.maximum(jnp.minimum(ty2, py2) - jnp.maximum(ty1, py1), 0.0)
    inter = iw * ih                                   # [TB, NOBJ, P]
    area_t = (tx2 - tx1) * (ty2 - ty1)                # [TB, NOBJ, 1]
    area_p = (px2 - px1) * (py2 - py1)                # [1, P]
    # exact IoU division: matches at the 0.5 threshold are sensitive
    overlaps = inter / (area_t + area_p - inter)      # [TB, NOBJ, P]

    best_prior_idx = _first_argmax(overlaps, axis=2)               # [TB, NOBJ, 1]
    best_truth_overlap = jnp.max(overlaps, axis=1, keepdims=True)  # [TB, 1, P]
    best_truth_idx = _first_argmax(overlaps, axis=1)               # [TB, 1, P]

    # force-match each truth's best prior (index_fill + last-write-wins loop)
    p_iota = lax.broadcasted_iota(jnp.int32, (1, 1, P), 2)
    n_iota = lax.broadcasted_iota(jnp.int32, (1, NOBJ, 1), 1)
    eq = best_prior_idx == p_iota                                  # [TB, NOBJ, P]
    is_best = jnp.any(eq, axis=1, keepdims=True)                   # [TB, 1, P]
    j_assigned = jnp.max(jnp.where(eq, n_iota, -1), axis=1, keepdims=True)
    best_truth_overlap = jnp.where(is_best, 2.0, best_truth_overlap)
    best_truth_idx = jnp.where(is_best, j_assigned, best_truth_idx)

    # gather matched truths / labels: one-hot reduce over NOBJ sublanes
    onehot = best_truth_idx == n_iota                              # [TB, NOBJ, P]
    onehot_f = onehot.astype(jnp.float32)
    m_x1 = jnp.sum(onehot_f * tx1, axis=1)                         # [TB, P]
    m_y1 = jnp.sum(onehot_f * ty1, axis=1)
    m_x2 = jnp.sum(onehot_f * tx2, axis=1)
    m_y2 = jnp.sum(onehot_f * ty2, axis=1)
    # labels gathered with integer ops (no float round-trip of class ids)
    labels_i = labels_ref[...]                                     # [TB, NOBJ, 1]
    matched_cls = jnp.sum(jnp.where(onehot, labels_i, 0), axis=1)  # [TB, P] int32

    overlap_p = best_truth_overlap[:, 0, :]                        # [TB, P]
    conf_t = jnp.where(overlap_p < OVERLAP_THRESH, 0, matched_cls + 1)
    pos = conf_t > 0                                               # [TB, P]

    # ---------------- encode localization targets (exact divides) ------------
    g_cx = ((m_x1 + m_x2) * 0.5 - pr_cx) / (var0 * pr_w)
    g_cy = ((m_y1 + m_y2) * 0.5 - pr_cy) / (var0 * pr_h)
    # the floor only guards unmatched / degenerate boxes against log(0)
    g_w = jnp.log(jnp.maximum((m_x2 - m_x1) / pr_w, 1e-12)) * (1.0 / var1)
    g_h = jnp.log(jnp.maximum((m_y2 - m_y1) / pr_h, 1e-12)) * (1.0 / var1)

    # ---------------- localization loss (Smooth L1, sum over positives) ------
    def sl1(pred, tgt):
        d = pred - tgt
        ad = jnp.abs(d)
        return jnp.where(ad < 1.0, 0.5 * ad * ad, ad - 0.5)

    l_elem = (sl1(loc_ref[0], g_cx) + sl1(loc_ref[1], g_cy) +
              sl1(loc_ref[2], g_w) + sl1(loc_ref[3], g_h))         # [TB, P]
    loss_l_i = jnp.sum(jnp.where(pos, l_elem, 0.0), axis=1, keepdims=True)

    # ---------- single shared log-sum-exp feeds mining and the final CE ------
    confs = [conf_ref[c] for c in range(C)]                        # C x [TB, P]
    rowmax = confs[0]
    for c in range(1, C):
        rowmax = jnp.maximum(rowmax, confs[c])
    sum_exp = jnp.zeros((TB, P), jnp.float32)
    conf_gt = jnp.zeros((TB, P), jnp.float32)
    for c in range(C):
        sum_exp = sum_exp + jnp.exp(confs[c] - rowmax)
        conf_gt = conf_gt + jnp.where(conf_t == c, confs[c], 0.0)
    ce = jnp.log(sum_exp) + rowmax - conf_gt                       # [TB, P]
    lc = jnp.where(pos, 0.0, ce)                                   # mining loss

    # ---------------- hard negative mining (chunked stable-sort rank) --------
    # rank[b,i] = #{j: lc[b,j] > lc[b,i]} + #{j < i: lc[b,j] == lc[b,i]}
    # Chunk the "j" axis onto sublanes: no [P,P] mask / cmp is materialized.
    i_iota = lax.broadcasted_iota(jnp.int32, (1, 1, P), 2)
    lc_i = lc[:, None, :]                                          # [TB, 1, P]
    rank = jnp.zeros((TB, P), jnp.int32)
    for j0 in range(0, P, rank_chunk):
        jc = min(rank_chunk, P - j0)
        lc_j = lc[:, j0:j0 + jc][:, :, None]                       # [TB, jc, 1]
        j_idx = j0 + lax.broadcasted_iota(jnp.int32, (1, jc, 1), 1)
        cmp = (lc_j > lc_i) | ((lc_j == lc_i) & (j_idx < i_iota))  # [TB, jc, P]
        rank = rank + jnp.sum(cmp.astype(jnp.int32), axis=1)

    num_pos_i = jnp.sum(pos.astype(jnp.int32), axis=1, keepdims=True)  # [TB, 1]
    num_neg_i = jnp.minimum(NEGPOS_RATIO * num_pos_i, P - 1)           # [TB, 1]
    neg = rank < num_neg_i                                             # [TB, P]

    # ---------------- confidence cross-entropy over (pos | neg) --------------
    sel = jnp.logical_or(pos, neg)
    loss_c_i = jnp.sum(jnp.where(sel, ce, 0.0), axis=1, keepdims=True)  # [TB, 1]

    # ---------------- per-image outputs (mask batch padding with where) ------
    img_idx = (pl.program_id(0) * TB +
               lax.broadcasted_iota(jnp.int32, (TB, 1), 0))
    valid = img_idx < num_valid                                        # [TB, 1]
    loss_l_i = jnp.where(valid, loss_l_i, 0.0)
    loss_c_i = jnp.where(valid, loss_c_i, 0.0)
    npos_f = jnp.where(valid, num_pos_i.astype(jnp.float32), 0.0)

    lane = lax.broadcasted_iota(jnp.int32, (1, 1, 128), 2)
    out_ref[...] = jnp.where(
        lane == 0, loss_l_i[:, :, None],
        jnp.where(lane == 1, loss_c_i[:, :, None],
                  jnp.where(lane == 2, npos_f[:, :, None], 0.0)))


def multibox_loss(loc_data, conf_data, priors, truths, labels, batch_block=None):
    """loc_data [B,P,4], conf_data [B,P,C], priors [P,4], truths [B,NOBJ,4],
    labels [B,NOBJ] -> (loss_l, loss_c) scalars."""
    B, P, _ = loc_data.shape
    C = conf_data.shape[-1]
    NOBJ = truths.shape[1]

    # batch-block size: fill the 8 vreg sublanes when the batch allows it; for
    # tiny batches use one full-batch block (second-minor block dim then equals
    # the full array dim, keeping the (8,128) alignment rule satisfied).
    if batch_block is not None:
        TB = batch_block
    elif B >= 8:
        TB = 8
    else:
        TB = B
    NB = pl.cdiv(B, TB)
    B_pad = NB * TB

    # layout glue: priors on lanes; coordinates / classes on the leading axis
    # so every per-coordinate / per-class slab inside the kernel is a full
    # (TB, P) vreg tile.
    # TODO(synk): at real SSD sizes these wrapper transposes re-read conf/loc
    # through HBM once; emit the activations in [C,B,P]/[4,B,P] upstream (or
    # fuse the transpose into the pallas_call inputs) to remove that traffic.
    loc_in = jnp.transpose(loc_data, (2, 0, 1)).astype(jnp.float32)    # [4,B,P]
    conf_in = jnp.transpose(conf_data, (2, 0, 1)).astype(jnp.float32)  # [C,B,P]
    priors_in = jnp.transpose(priors, (1, 0)).astype(jnp.float32)      # [4,P]
    truths_in = truths.astype(jnp.float32)                             # [B,NOBJ,4]
    labels_in = labels.astype(jnp.int32)[..., None]                    # [B,NOBJ,1]

    if B_pad != B:
        pad = B_pad - B
        loc_in = jnp.pad(loc_in, ((0, 0), (0, pad), (0, 0)))
        conf_in = jnp.pad(conf_in, ((0, 0), (0, pad), (0, 0)))
        truths_in = jnp.pad(truths_in, ((0, pad), (0, 0), (0, 0)))
        labels_in = jnp.pad(labels_in, ((0, pad), (0, 0), (0, 0)))

    kernel = functools.partial(multibox_loss_kernel, num_valid=B, rank_chunk=8)

    per_image = pl.pallas_call(
        kernel,
        out_shape=jax.ShapeDtypeStruct((B_pad, 1, 128), jnp.float32),
        grid_spec=pltpu.PrefetchScalarGridSpec(
            num_scalar_prefetch=0,
            grid=(NB,),
            in_specs=[
                pl.BlockSpec((4, TB, P), lambda b: (0, b, 0)),
                pl.BlockSpec((C, TB, P), lambda b: (0, b, 0)),
                pl.BlockSpec((4, P), lambda b: (0, 0)),
                pl.BlockSpec((TB, NOBJ, 4), lambda b: (b, 0, 0)),
                pl.BlockSpec((TB, NOBJ, 1), lambda b: (b, 0, 0)),
            ],
            out_specs=pl.BlockSpec((TB, 1, 128), lambda b: (b, 0, 0)),
        ),
        compiler_params=pltpu.CompilerParams(
            dimension_semantics=("parallel",)),
    )(loc_in, conf_in, priors_in, truths_in, labels_in)

    loss_l = jnp.sum(per_image[:, 0, 0])
    loss_c = jnp.sum(per_image[:, 0, 1])
    # guard against num_pos == 0 (PyTorch reference would divide by zero)
    n = jnp.maximum(jnp.sum(per_image[:, 0, 2]), 1.0)
    return loss_l / n, loss_c / n


if __name__ == "__main__":
    # small synthetic shapes consistent with the module's forward
    # TODO(synk): at real SSD prior counts (P~8732) the single-block-in-P and
    # chunked-rank design needs the two-pass tiled variant; P=128 here.
    B, P, C, NOBJ = 2, 128, NUM_CLASSES, 8
    key = jax.random.PRNGKey(0)
    k1, k2, k3, k4, k5, k6, k7 = jax.random.split(key, 7)

    loc_data = 0.1 * jax.random.normal(k1, (B, P, 4), jnp.float32)
    conf_data = jax.random.normal(k2, (B, P, C), jnp.float32)

    # priors in (cx, cy, w, h), inside the unit square
    cxcy = jax.random.uniform(k3, (P, 2), jnp.float32, 0.1, 0.9)
    wh = jax.random.uniform(k4, (P, 2), jnp.float32, 0.05, 0.3)
    priors = jnp.concatenate([cxcy, wh], axis=1)

    # ground-truth boxes (xmin, ymin, xmax, ymax) and labels
    # TODO(synk): PyTorch takes a variable-length list of targets per image;
    # here every image has a fixed NOBJ ground-truth boxes (no padding mask).
    ctr = jax.random.uniform(k5, (B, NOBJ, 2), jnp.float32, 0.2, 0.8)
    half = jax.random.uniform(k6, (B, NOBJ, 2), jnp.float32, 0.05, 0.15)
    truths = jnp.concatenate([ctr - half, ctr + half], axis=-1)
    labels = jax.random.randint(k7, (B, NOBJ), 0, C - 1).astype(jnp.float32)

    loss_l, loss_c = multibox_loss(loc_data, conf_data, priors, truths, labels)
    jax.block_until_ready((loss_l, loss_c))
    print("KERNEL_OK")
</pallas_src>

<mosaic_0001>
module attributes {stable_mosaic.version = 11 : i64} {
  func.func @multibox_loss_kernel(%arg0: i32, %arg1: memref<4x2x128xf32, #tpu.memory_space<vmem>>, %arg2: memref<4x2x128xf32, #tpu.memory_space<vmem>>, %arg3: memref<4x128xf32, #tpu.memory_space<vmem>>, %arg4: memref<2x8x4xf32, #tpu.memory_space<vmem>>, %arg5: memref<2x8x1xi32, #tpu.memory_space<vmem>>, %arg6: memref<2x1x128xf32, #tpu.memory_space<vmem>>) attributes {dimension_semantics = [#tpu.dimension_semantics<parallel>], iteration_bounds = array<i64: 1>, scalar_prefetch = 0 : i64, scratch_operands = 0 : i64, tpu.core_type = #tpu.core_type<tc>, window_params = [{transform_indices = @transform_0, window_bounds = array<i64: 4, 2, 128>}, {transform_indices = @transform_1, window_bounds = array<i64: 4, 2, 128>}, {pipeline_mode = #tpu.pipeline_mode<synchronous>, transform_indices = @transform_2, window_bounds = array<i64: 4, 128>}, {transform_indices = @transform_3, window_bounds = array<i64: 2, 8, 4>}, {transform_indices = @transform_4, window_bounds = array<i64: 2, 8, 1>}, {transform_indices = @transform_5, window_bounds = array<i64: 2, 1, 128>}]} {
    %c0 = arith.constant 0 : index
    %c0_0 = arith.constant 0 : index
    %0 = vector.load %arg3[%c0, %c0_0] : memref<4x128xf32, #tpu.memory_space<vmem>>, vector<1x128xf32>
    %c1 = arith.constant 1 : index
    %c0_1 = arith.constant 0 : index
    %1 = vector.load %arg3[%c1, %c0_1] : memref<4x128xf32, #tpu.memory_space<vmem>>, vector<1x128xf32>
    %c2 = arith.constant 2 : index
    %c0_2 = arith.constant 0 : index
    %2 = vector.load %arg3[%c2, %c0_2] : memref<4x128xf32, #tpu.memory_space<vmem>>, vector<1x128xf32>
    %c3 = arith.constant 3 : index
    %c0_3 = arith.constant 0 : index
    %3 = vector.load %arg3[%c3, %c0_3] : memref<4x128xf32, #tpu.memory_space<vmem>>, vector<1x128xf32>
    %cst = arith.constant 5.000000e-01 : f32
    %4 = vector.broadcast %cst : f32 to vector<1x128xf32>
    %5 = arith.mulf %2, %4 : vector<1x128xf32>
    %6 = arith.subf %0, %5 : vector<1x128xf32>
    %cst_4 = arith.constant 5.000000e-01 : f32
    %7 = vector.broadcast %cst_4 : f32 to vector<1x128xf32>
    %8 = arith.mulf %3, %7 : vector<1x128xf32>
    %9 = arith.subf %1, %8 : vector<1x128xf32>
    %cst_5 = arith.constant 5.000000e-01 : f32
    %10 = vector.broadcast %cst_5 : f32 to vector<1x128xf32>
    %11 = arith.mulf %2, %10 : vector<1x128xf32>
    %12 = arith.addf %0, %11 : vector<1x128xf32>
    %cst_6 = arith.constant 5.000000e-01 : f32
    %13 = vector.broadcast %cst_6 : f32 to vector<1x128xf32>
    %14 = arith.mulf %3, %13 : vector<1x128xf32>
    %15 = arith.addf %1, %14 : vector<1x128xf32>
    %c0_7 = arith.constant 0 : index
    %c0_8 = arith.constant 0 : index
    %c0_9 = arith.constant 0 : index
    %16 = vector.load %arg4[%c0_7, %c0_8, %c0_9] : memref<2x8x4xf32, #tpu.memory_space<vmem>>, vector<2x8x4xf32>
    %17 = vector.extract_strided_slice %16 {offsets = [0, 0, 0], sizes = [2, 8, 1], strides = [1, 1, 1]} : vector<2x8x4xf32> to vector<2x8x1xf32>
    %18 = vector.extract_strided_slice %16 {offsets = [0, 0, 1], sizes = [2, 8, 1], strides = [1, 1, 1]} : vector<2x8x4xf32> to vector<2x8x1xf32>
    %19 = vector.extract_strided_slice %16 {offsets = [0, 0, 2], sizes = [2, 8, 1], strides = [1, 1, 1]} : vector<2x8x4xf32> to vector<2x8x1xf32>
    %20 = vector.extract_strided_slice %16 {offsets = [0, 0, 3], sizes = [2, 8, 1], strides = [1, 1, 1]} : vector<2x8x4xf32> to vector<2x8x1xf32>
    %21 = vector.shape_cast %12 : vector<1x128xf32> to vector<1x1x128xf32>
    %22 = vector.broadcast %19 : vector<2x8x1xf32> to vector<2x8x128xf32>
    %23 = vector.broadcast %21 : vector<1x1x128xf32> to vector<2x8x128xf32>
    %24 = arith.minimumf %22, %23 : vector<2x8x128xf32>
    %25 = vector.shape_cast %6 : vector<1x128xf32> to vector<1x1x128xf32>
    %26 = vector.broadcast %17 : vector<2x8x1xf32> to vector<2x8x128xf32>
    %27 = vector.broadcast %25 : vector<1x1x128xf32> to vector<2x8x128xf32>
    %28 = arith.maximumf %26, %27 : vector<2x8x128xf32>
    %29 = arith.subf %24, %28 : vector<2x8x128xf32>
    %cst_10 = arith.constant 0.000000e+00 : f32
    %30 = vector.broadcast %cst_10 : f32 to vector<2x8x128xf32>
    %31 = arith.maximumf %29, %30 : vector<2x8x128xf32>
    %32 = vector.shape_cast %15 : vector<1x128xf32> to vector<1x1x128xf32>
    %33 = vector.broadcast %20 : vector<2x8x1xf32> to vector<2x8x128xf32>
    %34 = vector.broadcast %32 : vector<1x1x128xf32> to vector<2x8x128xf32>
    %35 = arith.minimumf %33, %34 : vector<2x8x128xf32>
    %36 = vector.shape_cast %9 : vector<1x128xf32> to vector<1x1x128xf32>
    %37 = vector.broadcast %18 : vector<2x8x1xf32> to vector<2x8x128xf32>
    %38 = vector.broadcast %36 : vector<1x1x128xf32> to vector<2x8x128xf32>
    %39 = arith.maximumf %37, %38 : vector<2x8x128xf32>
    %40 = arith.subf %35, %39 : vector<2x8x128xf32>
    %cst_11 = arith.constant 0.000000e+00 : f32
    %41 = vector.broadcast %cst_11 : f32 to vector<2x8x128xf32>
    %42 = arith.maximumf %40, %41 : vector<2x8x128xf32>
    %43 = arith.mulf %31, %42 : vector<2x8x128xf32>
    %44 = arith.subf %19, %17 : vector<2x8x1xf32>
    %45 = arith.subf %20, %18 : vector<2x8x1xf32>
    %46 = arith.mulf %44, %45 : vector<2x8x1xf32>
    %47 = arith.subf %12, %6 : vector<1x128xf32>
    %48 = arith.subf %15, %9 : vector<1x128xf32>
    %49 = arith.mulf %47, %48 : vector<1x128xf32>
    %50 = vector.shape_cast %49 : vector<1x128xf32> to vector<1x1x128xf32>
    %51 = vector.broadcast %46 : vector<2x8x1xf32> to vector<2x8x128xf32>
    %52 = vector.broadcast %50 : vector<1x1x128xf32> to vector<2x8x128xf32>
    %53 = arith.addf %51, %52 : vector<2x8x128xf32>
    %54 = arith.subf %53, %43 : vector<2x8x128xf32>
    %55 = arith.divf %43, %54 : vector<2x8x128xf32>
    %cst_12 = arith.constant dense<0xFF800000> : vector<2x8xf32>
    %56 = vector.multi_reduction <maximumf>, %55, %cst_12 [2] : vector<2x8x128xf32> to vector<2x8xf32>
    %57 = vector.shape_cast %56 : vector<2x8xf32> to vector<2x8x1xf32>
    %58 = tpu.iota {dimensions = array<i32: 2>} : vector<1x1x128xi32>
    %59 = vector.broadcast %57 : vector<2x8x1xf32> to vector<2x8x128xf32>
    %60 = arith.cmpf oeq, %55, %59 : vector<2x8x128xf32>
    %c128_i32 = arith.constant 128 : i32
    %61 = vector.shape_cast %58 : vector<1x1x128xi32> to vector<1x1x128xi32>
    %62 = vector.broadcast %61 : vector<1x1x128xi32> to vector<2x8x128xi32>
    %63 = vector.broadcast %c128_i32 : i32 to vector<2x8x128xi32>
    %64 = arith.select %60, %62, %63 : vector<2x8x128xi1>, vector<2x8x128xi32>
    %cst_13 = arith.constant dense<2147483647> : vector<2x8xi32>
    %65 = vector.multi_reduction <minsi>, %64, %cst_13 [2] : vector<2x8x128xi32> to vector<2x8xi32>
    %66 = vector.shape_cast %65 : vector<2x8xi32> to vector<2x8x1xi32>
    %cst_14 = arith.constant dense<0xFF800000> : vector<2x128xf32>
    %67 = vector.multi_reduction <maximumf>, %55, %cst_14 [1] : vector<2x8x128xf32> to vector<2x128xf32>
    %68 = vector.shape_cast %67 : vector<2x128xf32> to vector<2x1x128xf32>
    %cst_15 = arith.constant dense<0xFF800000> : vector<2x128xf32>
    %69 = vector.multi_reduction <maximumf>, %55, %cst_15 [1] : vector<2x8x128xf32> to vector<2x128xf32>
    %70 = vector.shape_cast %69 : vector<2x128xf32> to vector<2x1x128xf32>
    %71 = tpu.iota {dimensions = array<i32: 1>} : vector<1x8x1xi32>
    %72 = vector.broadcast %70 : vector<2x1x128xf32> to vector<2x8x128xf32>
    %73 = arith.cmpf oeq, %55, %72 : vector<2x8x128xf32>
    %c8_i32 = arith.constant 8 : i32
    %74 = vector.shape_cast %71 : vector<1x8x1xi32> to vector<1x8x1xi32>
    %75 = vector.broadcast %74 : vector<1x8x1xi32> to vector<2x8x128xi32>
    %76 = vector.broadcast %c8_i32 : i32 to vector<2x8x128xi32>
    %77 = arith.select %73, %75, %76 : vector<2x8x128xi1>, vector<2x8x128xi32>
    %cst_16 = arith.constant dense<2147483647> : vector<2x128xi32>
    %78 = vector.multi_reduction <minsi>, %77, %cst_16 [1] : vector<2x8x128xi32> to vector<2x128xi32>
    %79 = vector.shape_cast %78 : vector<2x128xi32> to vector<2x1x128xi32>
    %80 = tpu.iota {dimensions = array<i32: 2>} : vector<1x1x128xi32>
    %81 = tpu.iota {dimensions = array<i32: 1>} : vector<1x8x1xi32>
    %82 = vector.broadcast %66 : vector<2x8x1xi32> to vector<2x8x128xi32>
    %83 = vector.broadcast %80 : vector<1x1x128xi32> to vector<2x8x128xi32>
    %84 = arith.cmpi eq, %82, %83 : vector<2x8x128xi32>
    %cst_17 = arith.constant 1.000000e+00 : f32
    %cst_18 = arith.constant 0.000000e+00 : f32
    %85 = vector.broadcast %cst_17 : f32 to vector<2x8x128xf32>
    %86 = vector.broadcast %cst_18 : f32 to vector<2x8x128xf32>
    %87 = arith.select %84, %85, %86 : vector<2x8x128xi1>, vector<2x8x128xf32>
    %cst_19 = arith.constant dense<0xFF800000> : vector<2x128xf32>
    %88 = vector.multi_reduction <maximumf>, %87, %cst_19 [1] : vector<2x8x128xf32> to vector<2x128xf32>
    %cst_20 = arith.constant 0.000000e+00 : f32
    %89 = vector.broadcast %cst_20 : f32 to vector<2x128xf32>
    %90 = arith.cmpf ogt, %88, %89 : vector<2x128xf32>
    %91 = vector.shape_cast %90 : vector<2x128xi1> to vector<2x1x128xi1>
    %c-1_i32 = arith.constant -1 : i32
    %92 = vector.shape_cast %81 : vector<1x8x1xi32> to vector<1x8x1xi32>
    %93 = vector.broadcast %92 : vector<1x8x1xi32> to vector<2x8x128xi32>
    %94 = vector.broadcast %c-1_i32 : i32 to vector<2x8x128xi32>
    %95 = arith.select %84, %93, %94 : vector<2x8x128xi1>, vector<2x8x128xi32>
    %cst_21 = arith.constant dense<-2147483648> : vector<2x128xi32>
    %96 = vector.multi_reduction <maxsi>, %95, %cst_21 [1] : vector<2x8x128xi32> to vector<2x128xi32>
    %97 = vector.shape_cast %96 : vector<2x128xi32> to vector<2x1x128xi32>
    %cst_22 = arith.constant 2.000000e+00 : f32
    %98 = vector.broadcast %cst_22 : f32 to vector<2x1x128xf32>
    %99 = arith.select %91, %98, %68 : vector<2x1x128xi1>, vector<2x1x128xf32>
    %100 = arith.select %91, %97, %79 : vector<2x1x128xi1>, vector<2x1x128xi32>
    %101 = vector.broadcast %100 : vector<2x1x128xi32> to vector<2x8x128xi32>
    %102 = vector.broadcast %81 : vector<1x8x1xi32> to vector<2x8x128xi32>
    %103 = arith.cmpi eq, %101, %102 : vector<2x8x128xi32>
    %104 = arith.extui %103 : vector<2x8x128xi1> to vector<2x8x128xi32>
    %105 = arith.sitofp %104 : vector<2x8x128xi32> to vector<2x8x128xf32>
    %106 = vector.broadcast %17 : vector<2x8x1xf32> to vector<2x8x128xf32>
    %107 = arith.mulf %105, %106 : vector<2x8x128xf32>
    %cst_23 = arith.constant dense<0.000000e+00> : vector<2x128xf32>
    %108 = vector.multi_reduction <add>, %107, %cst_23 [1] : vector<2x8x128xf32> to vector<2x128xf32>
    %109 = vector.broadcast %18 : vector<2x8x1xf32> to vector<2x8x128xf32>
    %110 = arith.mulf %105, %109 : vector<2x8x128xf32>
    %cst_24 = arith.constant dense<0.000000e+00> : vector<2x128xf32>
    %111 = vector.multi_reduction <add>, %110, %cst_24 [1] : vector<2x8x128xf32> to vector<2x128xf32>
    %112 = vector.broadcast %19 : vector<2x8x1xf32> to vector<2x8x128xf32>
    %113 = arith.mulf %105, %112 : vector<2x8x128xf32>
    %cst_25 = arith.constant dense<0.000000e+00> : vector<2x128xf32>
    %114 = vector.multi_reduction <add>, %113, %cst_25 [1] : vector<2x8x128xf32> to vector<2x128xf32>
    %115 = vector.broadcast %20 : vector<2x8x1xf32> to vector<2x8x128xf32>
    %116 = arith.mulf %105, %115 : vector<2x8x128xf32>
    %cst_26 = arith.constant dense<0.000000e+00> : vector<2x128xf32>
    %117 = vector.multi_reduction <add>, %116, %cst_26 [1] : vector<2x8x128xf32> to vector<2x128xf32>
    %c0_27 = arith.constant 0 : index
    %c0_28 = arith.constant 0 : index
    %c0_29 = arith.constant 0 : index
    %118 = vector.load %arg5[%c0_27, %c0_28, %c0_29] : memref<2x8x1xi32, #tpu.memory_space<vmem>>, vector<2x8x1xi32>
    %c0_i32 = arith.constant 0 : i32
    %119 = vector.shape_cast %118 : vector<2x8x1xi32> to vector<2x8x1xi32>
    %120 = vector.broadcast %119 : vector<2x8x1xi32> to vector<2x8x128xi32>
    %121 = vector.broadcast %c0_i32 : i32 to vector<2x8x128xi32>
    %122 = arith.select %103, %120, %121 : vector<2x8x128xi1>, vector<2x8x128xi32>
    %cst_30 = arith.constant dense<0> : vector<2x128xi32>
    %123 = vector.multi_reduction <add>, %122, %cst_30 [1] : vector<2x8x128xi32> to vector<2x128xi32>
    %124 = vector.shape_cast %99 : vector<2x1x128xf32> to vector<2x128xf32>
    %cst_31 = arith.constant 5.000000e-01 : f32
    %125 = vector.broadcast %cst_31 : f32 to vector<2x128xf32>
    %126 = arith.cmpf olt, %124, %125 : vector<2x128xf32>
    %c1_i32 = arith.constant 1 : i32
    %127 = vector.broadcast %c1_i32 : i32 to vector<2x128xi32>
    %128 = arith.addi %123, %127 : vector<2x128xi32>
    %c0_i32_32 = arith.constant 0 : i32
    %129 = vector.broadcast %c0_i32_32 : i32 to vector<2x128xi32>
    %130 = arith.select %126, %129, %128 : vector<2x128xi1>, vector<2x128xi32>
    %c0_i32_33 = arith.constant 0 : i32
    %131 = vector.broadcast %c0_i32_33 : i32 to vector<2x128xi32>
    %132 = arith.cmpi sgt, %130, %131 : vector<2x128xi32>
    %133 = arith.addf %108, %114 : vector<2x128xf32>
    %cst_34 = arith.constant 5.000000e-01 : f32
    %134 = vector.broadcast %cst_34 : f32 to vector<2x128xf32>
    %135 = arith.mulf %133, %134 : vector<2x128xf32>
    %136 = vector.broadcast %0 : vector<1x128xf32> to vector<2x128xf32>
    %137 = arith.subf %135, %136 : vector<2x128xf32>
    %cst_35 = arith.constant 1.000000e-01 : f32
    %138 = vector.broadcast %cst_35 : f32 to vector<1x128xf32>
    %139 = arith.mulf %138, %2 : vector<1x128xf32>
    %140 = vector.broadcast %139 : vector<1x128xf32> to vector<2x128xf32>
    %141 = arith.divf %137, %140 : vector<2x128xf32>
    %142 = arith.addf %111, %117 : vector<2x128xf32>
    %cst_36 = arith.constant 5.000000e-01 : f32
    %143 = vector.broadcast %cst_36 : f32 to vector<2x128xf32>
    %144 = arith.mulf %142, %143 : vector<2x128xf32>
    %145 = vector.broadcast %1 : vector<1x128xf32> to vector<2x128xf32>
    %146 = arith.subf %144, %145 : vector<2x128xf32>
    %cst_37 = arith.constant 1.000000e-01 : f32
    %147 = vector.broadcast %cst_37 : f32 to vector<1x128xf32>
    %148 = arith.mulf %147, %3 : vector<1x128xf32>
    %149 = vector.broadcast %148 : vector<1x128xf32> to vector<2x128xf32>
    %150 = arith.divf %146, %149 : vector<2x128xf32>
    %151 = arith.subf %114, %108 : vector<2x128xf32>
    %152 = vector.broadcast %2 : vector<1x128xf32> to vector<2x128xf32>
    %153 = arith.divf %151, %152 : vector<2x128xf32>
    %cst_38 = arith.constant 9.99999996E-13 : f32
    %154 = vector.broadcast %cst_38 : f32 to vector<2x128xf32>
    %155 = arith.maximumf %153, %154 : vector<2x128xf32>
    %156 = math.log %155 : vector<2x128xf32>
    %cst_39 = arith.constant 5.000000e+00 : f32
    %157 = vector.broadcast %cst_39 : f32 to vector<2x128xf32>
    %158 = arith.mulf %156, %157 : vector<2x128xf32>
    %159 = arith.subf %117, %111 : vector<2x128xf32>
    %160 = vector.broadcast %3 : vector<1x128xf32> to vector<2x128xf32>
    %161 = arith.divf %159, %160 : vector<2x128xf32>
    %cst_40 = arith.constant 9.99999996E-13 : f32
    %162 = vector.broadcast %cst_40 : f32 to vector<2x128xf32>
    %163 = arith.maximumf %161, %162 : vector<2x128xf32>
    %164 = math.log %163 : vector<2x128xf32>
    %cst_41 = arith.constant 5.000000e+00 : f32
    %165 = vector.broadcast %cst_41 : f32 to vector<2x128xf32>
    %166 = arith.mulf %164, %165 : vector<2x128xf32>
    %c0_42 = arith.constant 0 : index
    %c0_43 = arith.constant 0 : index
    %c0_44 = arith.constant 0 : index
    %167 = vector.load %arg1[%c0_42, %c0_43, %c0_44] : memref<4x2x128xf32, #tpu.memory_space<vmem>>, vector<1x2x128xf32>
    %168 = vector.shape_cast %167 : vector<1x2x128xf32> to vector<2x128xf32>
    %169 = arith.subf %168, %141 : vector<2x128xf32>
    %170 = math.absf %169 : vector<2x128xf32>
    %cst_45 = arith.constant 1.000000e+00 : f32
    %171 = vector.broadcast %cst_45 : f32 to vector<2x128xf32>
    %172 = arith.cmpf olt, %170, %171 : vector<2x128xf32>
    %cst_46 = arith.constant 5.000000e-01 : f32
    %173 = vector.broadcast %cst_46 : f32 to vector<2x128xf32>
    %174 = arith.mulf %173, %170 : vector<2x128xf32>
    %175 = arith.mulf %174, %170 : vector<2x128xf32>
    %cst_47 = arith.constant 5.000000e-01 : f32
    %176 = vector.broadcast %cst_47 : f32 to vector<2x128xf32>
    %177 = arith.subf %170, %176 : vector<2x128xf32>
    %178 = arith.select %172, %175, %177 : vector<2x128xi1>, vector<2x128xf32>
    %c1_48 = arith.constant 1 : index
    %c0_49 = arith.constant 0 : index
    %c0_50 = arith.constant 0 : index
    %179 = vector.load %arg1[%c1_48, %c0_49, %c0_50] : memref<4x2x128xf32, #tpu.memory_space<vmem>>, vector<1x2x128xf32>
    %180 = vector.shape_cast %179 : vector<1x2x128xf32> to vector<2x128xf32>
    %181 = arith.subf %180, %150 : vector<2x128xf32>
    %182 = math.absf %181 : vector<2x128xf32>
    %cst_51 = arith.constant 1.000000e+00 : f32
    %183 = vector.broadcast %cst_51 : f32 to vector<2x128xf32>
    %184 = arith.cmpf olt, %182, %183 : vector<2x128xf32>
    %cst_52 = arith.constant 5.000000e-01 : f32
    %185 = vector.broadcast %cst_52 : f32 to vector<2x128xf32>
    %186 = arith.mulf %185, %182 : vector<2x128xf32>
    %187 = arith.mulf %186, %182 : vector<2x128xf32>
    %cst_53 = arith.constant 5.000000e-01 : f32
    %188 = vector.broadcast %cst_53 : f32 to vector<2x128xf32>
    %189 = arith.subf %182, %188 : vector<2x128xf32>
    %190 = arith.select %184, %187, %189 : vector<2x128xi1>, vector<2x128xf32>
    %191 = arith.addf %178, %190 : vector<2x128xf32>
    %c2_54 = arith.constant 2 : index
    %c0_55 = arith.constant 0 : index
    %c0_56 = arith.constant 0 : index
    %192 = vector.load %arg1[%c2_54, %c0_55, %c0_56] : memref<4x2x128xf32, #tpu.memory_space<vmem>>, vector<1x2x128xf32>
    %193 = vector.shape_cast %192 : vector<1x2x128xf32> to vector<2x128xf32>
    %194 = arith.subf %193, %158 : vector<2x128xf32>
    %195 = math.absf %194 : vector<2x128xf32>
    %cst_57 = arith.constant 1.000000e+00 : f32
    %196 = vector.broadcast %cst_57 : f32 to vector<2x128xf32>
    %197 = arith.cmpf olt, %195, %196 : vector<2x128xf32>
    %cst_58 = arith.constant 5.000000e-01 : f32
    %198 = vector.broadcast %cst_58 : f32 to vector<2x128xf32>
    %199 = arith.mulf %198, %195 : vector<2x128xf32>
    %200 = arith.mulf %199, %195 : vector<2x128xf32>
    %cst_59 = arith.constant 5.000000e-01 : f32
    %201 = vector.broadcast %cst_59 : f32 to vector<2x128xf32>
    %202 = arith.subf %195, %201 : vector<2x128xf32>
    %203 = arith.select %197, %200, %202 : vector<2x128xi1>, vector<2x128xf32>
    %204 = arith.addf %191, %203 : vector<2x128xf32>
    %c3_60 = arith.constant 3 : index
    %c0_61 = arith.constant 0 : index
    %c0_62 = arith.constant 0 : index
    %205 = vector.load %arg1[%c3_60, %c0_61, %c0_62] : memref<4x2x128xf32, #tpu.memory_space<vmem>>, vector<1x2x128xf32>
    %206 = vector.shape_cast %205 : vector<1x2x128xf32> to vector<2x128xf32>
    %207 = arith.subf %206, %166 : vector<2x128xf32>
    %208 = math.absf %207 : vector<2x128xf32>
    %cst_63 = arith.constant 1.000000e+00 : f32
    %209 = vector.broadcast %cst_63 : f32 to vector<2x128xf32>
    %210 = arith.cmpf olt, %208, %209 : vector<2x128xf32>
    %cst_64 = arith.constant 5.000000e-01 : f32
    %211 = vector.broadcast %cst_64 : f32 to vector<2x128xf32>
    %212 = arith.mulf %211, %208 : vector<2x128xf32>
    %213 = arith.mulf %212, %208 : vector<2x128xf32>
    %cst_65 = arith.constant 5.000000e-01 : f32
    %214 = vector.broadcast %cst_65 : f32 to vector<2x128xf32>
    %215 = arith.subf %208, %214 : vector<2x128xf32>
    %216 = arith.select %210, %213, %215 : vector<2x128xi1>, vector<2x128xf32>
    %217 = arith.addf %204, %216 : vector<2x128xf32>
    %cst_66 = arith.constant 0.000000e+00 : f32
    %218 = vector.broadcast %cst_66 : f32 to vector<2x128xf32>
    %219 = arith.select %132, %217, %218 : vector<2x128xi1>, vector<2x128xf32>
    %cst_67 = arith.constant dense<0.000000e+00> : vector<2xf32>
    %220 = vector.multi_reduction <add>, %219, %cst_67 [1] : vector<2x128xf32> to vector<2xf32>
    %221 = vector.shape_cast %220 : vector<2xf32> to vector<2x1xf32>
    %c0_68 = arith.constant 0 : index
    %c0_69 = arith.constant 0 : index
    %c0_70 = arith.constant 0 : index
    %222 = vector.load %arg2[%c0_68, %c0_69, %c0_70] : memref<4x2x128xf32, #tpu.memory_space<vmem>>, vector<1x2x128xf32>
    %223 = vector.shape_cast %222 : vector<1x2x128xf32> to vector<2x128xf32>
    %c1_71 = arith.constant 1 : index
    %c0_72 = arith.constant 0 : index
    %c0_73 = arith.constant 0 : index
    %224 = vector.load %arg2[%c1_71, %c0_72, %c0_73] : memref<4x2x128xf32, #tpu.memory_space<vmem>>, vector<1x2x128xf32>
    %225 = vector.shape_cast %224 : vector<1x2x128xf32> to vector<2x128xf32>
    %c2_74 = arith.constant 2 : index
    %c0_75 = arith.constant 0 : index
    %c0_76 = arith.constant 0 : index
    %226 = vector.load %arg2[%c2_74, %c0_75, %c0_76] : memref<4x2x128xf32, #tpu.memory_space<vmem>>, vector<1x2x128xf32>
    %227 = vector.shape_cast %226 : vector<1x2x128xf32> to vector<2x128xf32>
    %c3_77 = arith.constant 3 : index
    %c0_78 = arith.constant 0 : index
    %c0_79 = arith.constant 0 : index
    %228 = vector.load %arg2[%c3_77, %c0_78, %c0_79] : memref<4x2x128xf32, #tpu.memory_space<vmem>>, vector<1x2x128xf32>
    %229 = vector.shape_cast %228 : vector<1x2x128xf32> to vector<2x128xf32>
    %230 = arith.maximumf %223, %225 : vector<2x128xf32>
    %231 = arith.maximumf %230, %227 : vector<2x128xf32>
    %232 = arith.maximumf %231, %229 : vector<2x128xf32>
    %cst_80 = arith.constant 0.000000e+00 : f32
    %233 = vector.broadcast %cst_80 : f32 to vector<2x128xf32>
    %cst_81 = arith.constant 0.000000e+00 : f32
    %234 = vector.broadcast %cst_81 : f32 to vector<2x128xf32>
    %235 = arith.subf %223, %232 : vector<2x128xf32>
    %236 = math.exp %235 : vector<2x128xf32>
    %237 = arith.addf %233, %236 : vector<2x128xf32>
    %c0_i32_82 = arith.constant 0 : i32
    %238 = vector.broadcast %c0_i32_82 : i32 to vector<2x128xi32>
    %239 = arith.cmpi eq, %130, %238 : vector<2x128xi32>
    %cst_83 = arith.constant 0.000000e+00 : f32
    %240 = vector.broadcast %cst_83 : f32 to vector<2x128xf32>
    %241 = arith.select %239, %223, %240 : vector<2x128xi1>, vector<2x128xf32>
    %242 = arith.addf %234, %241 : vector<2x128xf32>
    %243 = arith.subf %225, %232 : vector<2x128xf32>
    %244 = math.exp %243 : vector<2x128xf32>
    %245 = arith.addf %237, %244 : vector<2x128xf32>
    %c1_i32_84 = arith.constant 1 : i32
    %246 = vector.broadcast %c1_i32_84 : i32 to vector<2x128xi32>
    %247 = arith.cmpi eq, %130, %246 : vector<2x128xi32>
    %cst_85 = arith.constant 0.000000e+00 : f32
    %248 = vector.broadcast %cst_85 : f32 to vector<2x128xf32>
    %249 = arith.select %247, %225, %248 : vector<2x128xi1>, vector<2x128xf32>
    %250 = arith.addf %242, %249 : vector<2x128xf32>
    %251 = arith.subf %227, %232 : vector<2x128xf32>
    %252 = math.exp %251 : vector<2x128xf32>
    %253 = arith.addf %245, %252 : vector<2x128xf32>
    %c2_i32 = arith.constant 2 : i32
    %254 = vector.broadcast %c2_i32 : i32 to vector<2x128xi32>
    %255 = arith.cmpi eq, %130, %254 : vector<2x128xi32>
    %cst_86 = arith.constant 0.000000e+00 : f32
    %256 = vector.broadcast %cst_86 : f32 to vector<2x128xf32>
    %257 = arith.select %255, %227, %256 : vector<2x128xi1>, vector<2x128xf32>
    %258 = arith.addf %250, %257 : vector<2x128xf32>
    %259 = arith.subf %229, %232 : vector<2x128xf32>
    %260 = math.exp %259 : vector<2x128xf32>
    %261 = arith.addf %253, %260 : vector<2x128xf32>
    %c3_i32 = arith.constant 3 : i32
    %262 = vector.broadcast %c3_i32 : i32 to vector<2x128xi32>
    %263 = arith.cmpi eq, %130, %262 : vector<2x128xi32>
    %cst_87 = arith.constant 0.000000e+00 : f32
    %264 = vector.broadcast %cst_87 : f32 to vector<2x128xf32>
    %265 = arith.select %263, %229, %264 : vector<2x128xi1>, vector<2x128xf32>
    %266 = arith.addf %258, %265 : vector<2x128xf32>
    %267 = math.log %261 : vector<2x128xf32>
    %268 = arith.addf %267, %232 : vector<2x128xf32>
    %269 = arith.subf %268, %266 : vector<2x128xf32>
    %cst_88 = arith.constant 0.000000e+00 : f32
    %270 = vector.broadcast %cst_88 : f32 to vector<2x128xf32>
    %271 = arith.select %132, %270, %269 : vector<2x128xi1>, vector<2x128xf32>
    %272 = tpu.iota {dimensions = array<i32: 2>} : vector<1x1x128xi32>
    %273 = vector.shape_cast %271 : vector<2x128xf32> to vector<2x1x128xf32>
    %c0_i32_89 = arith.constant 0 : i32
    %274 = vector.broadcast %c0_i32_89 : i32 to vector<2x128xi32>
    %275 = vector.extract_strided_slice %271 {offsets = [0, 0], sizes = [2, 8], strides = [1, 1]} : vector<2x128xf32> to vector<2x8xf32>
    %276 = vector.shape_cast %275 : vector<2x8xf32> to vector<2x8x1xf32>
    %277 = tpu.iota {dimensions = array<i32: 1>} : vector<1x8x1xi32>
    %c0_i32_90 = arith.constant 0 : i32
    %278 = vector.broadcast %c0_i32_90 : i32 to vector<1x8x1xi32>
    %279 = arith.addi %278, %277 : vector<1x8x1xi32>
    %280 = vector.broadcast %276 : vector<2x8x1xf32> to vector<2x8x128xf32>
    %281 = vector.broadcast %273 : vector<2x1x128xf32> to vector<2x8x128xf32>
    %282 = arith.cmpf ogt, %280, %281 : vector<2x8x128xf32>
    %283 = vector.broadcast %276 : vector<2x8x1xf32> to vector<2x8x128xf32>
    %284 = vector.broadcast %273 : vector<2x1x128xf32> to vector<2x8x128xf32>
    %285 = arith.cmpf oeq, %283, %284 : vector<2x8x128xf32>
    %286 = vector.broadcast %279 : vector<1x8x1xi32> to vector<1x8x128xi32>
    %287 = vector.broadcast %272 : vector<1x1x128xi32> to vector<1x8x128xi32>
    %288 = arith.cmpi slt, %286, %287 : vector<1x8x128xi32>
    %289 = vector.broadcast %288 : vector<1x8x128xi1> to vector<2x8x128xi1>
    %290 = arith.andi %285, %289 : vector<2x8x128xi1>
    %291 = arith.ori %282, %290 : vector<2x8x128xi1>
    %292 = arith.extui %291 : vector<2x8x128xi1> to vector<2x8x128xi32>
    %cst_91 = arith.constant dense<0> : vector<2x128xi32>
    %293 = vector.multi_reduction <add>, %292, %cst_91 [1] : vector<2x8x128xi32> to vector<2x128xi32>
    %294 = arith.addi %274, %293 : vector<2x128xi32>
    %295 = vector.extract_strided_slice %271 {offsets = [0, 8], sizes = [2, 8], strides = [1, 1]} : vector<2x128xf32> to vector<2x8xf32>
    %296 = vector.shape_cast %295 : vector<2x8xf32> to vector<2x8x1xf32>
    %297 = tpu.iota {dimensions = array<i32: 1>} : vector<1x8x1xi32>
    %c8_i32_92 = arith.constant 8 : i32
    %298 = vector.broadcast %c8_i32_92 : i32 to vector<1x8x1xi32>
    %299 = arith.addi %298, %297 : vector<1x8x1xi32>
    %300 = vector.broadcast %296 : vector<2x8x1xf32> to vector<2x8x128xf32>
    %301 = vector.broadcast %273 : vector<2x1x128xf32> to vector<2x8x128xf32>
    %302 = arith.cmpf ogt, %300, %301 : vector<2x8x128xf32>
    %303 = vector.broadcast %296 : vector<2x8x1xf32> to vector<2x8x128xf32>
    %304 = vector.broadcast %273 : vector<2x1x128xf32> to vector<2x8x128xf32>
    %305 = arith.cmpf oeq, %303, %304 : vector<2x8x128xf32>
    %306 = vector.broadcast %299 : vector<1x8x1xi32> to vector<1x8x128xi32>
    %307 = vector.broadcast %272 : vector<1x1x128xi32> to vector<1x8x128xi32>
    %308 = arith.cmpi slt, %306, %307 : vector<1x8x128xi32>
    %309 = vector.broadcast %308 : vector<1x8x128xi1> to vector<2x8x128xi1>
    %310 = arith.andi %305, %309 : vector<2x8x128xi1>
    %311 = arith.ori %302, %310 : vector<2x8x128xi1>
    %312 = arith.extui %311 : vector<2x8x128xi1> to vector<2x8x128xi32>
    %cst_93 = arith.constant dense<0> : vector<2x128xi32>
    %313 = vector.multi_reduction <add>, %312, %cst_93 [1] : vector<2x8x128xi32> to vector<2x128xi32>
    %314 = arith.addi %294, %313 : vector<2x128xi32>
    %315 = vector.extract_strided_slice %271 {offsets = [0, 16], sizes = [2, 8], strides = [1, 1]} : vector<2x128xf32> to vector<2x8xf32>
    %316 = vector.shape_cast %315 : vector<2x8xf32> to vector<2x8x1xf32>
    %317 = tpu.iota {dimensions = array<i32: 1>} : vector<1x8x1xi32>
    %c16_i32 = arith.constant 16 : i32
    %318 = vector.broadcast %c16_i32 : i32 to vector<1x8x1xi32>
    %319 = arith.addi %318, %317 : vector<1x8x1xi32>
    %320 = vector.broadcast %316 : vector<2x8x1xf32> to vector<2x8x128xf32>
    %321 = vector.broadcast %273 : vector<2x1x128xf32> to vector<2x8x128xf32>
    %322 = arith.cmpf ogt, %320, %321 : vector<2x8x128xf32>
    %323 = vector.broadcast %316 : vector<2x8x1xf32> to vector<2x8x128xf32>
    %324 = vector.broadcast %273 : vector<2x1x128xf32> to vector<2x8x128xf32>
    %325 = arith.cmpf oeq, %323, %324 : vector<2x8x128xf32>
    %326 = vector.broadcast %319 : vector<1x8x1xi32> to vector<1x8x128xi32>
    %327 = vector.broadcast %272 : vector<1x1x128xi32> to vector<1x8x128xi32>
    %328 = arith.cmpi slt, %326, %327 : vector<1x8x128xi32>
    %329 = vector.broadcast %328 : vector<1x8x128xi1> to vector<2x8x128xi1>
    %330 = arith.andi %325, %329 : vector<2x8x128xi1>
    %331 = arith.ori %322, %330 : vector<2x8x128xi1>
    %332 = arith.extui %331 : vector<2x8x128xi1> to vector<2x8x128xi32>
    %cst_94 = arith.constant dense<0> : vector<2x128xi32>
    %333 = vector.multi_reduction <add>, %332, %cst_94 [1] : vector<2x8x128xi32> to vector<2x128xi32>
    %334 = arith.addi %314, %333 : vector<2x128xi32>
    %335 = vector.extract_strided_slice %271 {offsets = [0, 24], sizes = [2, 8], strides = [1, 1]} : vector<2x128xf32> to vector<2x8xf32>
    %336 = vector.shape_cast %335 : vector<2x8xf32> to vector<2x8x1xf32>
    %337 = tpu.iota {dimensions = array<i32: 1>} : vector<1x8x1xi32>
    %c24_i32 = arith.constant 24 : i32
    %338 = vector.broadcast %c24_i32 : i32 to vector<1x8x1xi32>
    %339 = arith.addi %338, %337 : vector<1x8x1xi32>
    %340 = vector.broadcast %336 : vector<2x8x1xf32> to vector<2x8x128xf32>
    %341 = vector.broadcast %273 : vector<2x1x128xf32> to vector<2x8x128xf32>
    %342 = arith.cmpf ogt, %340, %341 : vector<2x8x128xf32>
    %343 = vector.broadcast %336 : vector<2x8x1xf32> to vector<2x8x128xf32>
    %344 = vector.broadcast %273 : vector<2x1x128xf32> to vector<2x8x128xf32>
    %345 = arith.cmpf oeq, %343, %344 : vector<2x8x128xf32>
    %346 = vector.broadcast %339 : vector<1x8x1xi32> to vector<1x8x128xi32>
    %347 = vector.broadcast %272 : vector<1x1x128xi32> to vector<1x8x128xi32>
    %348 = arith.cmpi slt, %346, %347 : vector<1x8x128xi32>
    %349 = vector.broadcast %348 : vector<1x8x128xi1> to vector<2x8x128xi1>
    %350 = arith.andi %345, %349 : vector<2x8x128xi1>
    %351 = arith.ori %342, %350 : vector<2x8x128xi1>
    %352 = arith.extui %351 : vector<2x8x128xi1> to vector<2x8x128xi32>
    %cst_95 = arith.constant dense<0> : vector<2x128xi32>
    %353 = vector.multi_reduction <add>, %352, %cst_95 [1] : vector<2x8x128xi32> to vector<2x128xi32>
    %354 = arith.addi %334, %353 : vector<2x128xi32>
    %355 = vector.extract_strided_slice %271 {offsets = [0, 32], sizes = [2, 8], strides = [1, 1]} : vector<2x128xf32> to vector<2x8xf32>
    %356 = vector.shape_cast %355 : vector<2x8xf32> to vector<2x8x1xf32>
    %357 = tpu.iota {dimensions = array<i32: 1>} : vector<1x8x1xi32>
    %c32_i32 = arith.constant 32 : i32
    %358 = vector.broadcast %c32_i32 : i32 to vector<1x8x1xi32>
    %359 = arith.addi %358, %357 : vector<1x8x1xi32>
    %360 = vector.broadcast %356 : vector<2x8x1xf32> to vector<2x8x128xf32>
    %361 = vector.broadcast %273 : vector<2x1x128xf32> to vector<2x8x128xf32>
    %362 = arith.cmpf ogt, %360, %361 : vector<2x8x128xf32>
    %363 = vector.broadcast %356 : vector<2x8x1xf32> to vector<2x8x128xf32>
    %364 = vector.broadcast %273 : vector<2x1x128xf32> to vector<2x8x128xf32>
    %365 = arith.cmpf oeq, %363, %364 : vector<2x8x128xf32>
    %366 = vector.broadcast %359 : vector<1x8x1xi32> to vector<1x8x128xi32>
    %367 = vector.broadcast %272 : vector<1x1x128xi32> to vector<1x8x128xi32>
    %368 = arith.cmpi slt, %366, %367 : vector<1x8x128xi32>
    %369 = vector.broadcast %368 : vector<1x8x128xi1> to vector<2x8x128xi1>
    %370 = arith.andi %365, %369 : vector<2x8x128xi1>
    %371 = arith.ori %362, %370 : vector<2x8x128xi1>
    %372 = arith.extui %371 : vector<2x8x128xi1> to vector<2x8x128xi32>
    %cst_96 = arith.constant dense<0> : vector<2x128xi32>
    %373 = vector.multi_reduction <add>, %372, %cst_96 [1] : vector<2x8x128xi32> to vector<2x128xi32>
    %374 = arith.addi %354, %373 : vector<2x128xi32>
    %375 = vector.extract_strided_slice %271 {offsets = [0, 40], sizes = [2, 8], strides = [1, 1]} : vector<2x128xf32> to vector<2x8xf32>
    %376 = vector.shape_cast %375 : vector<2x8xf32> to vector<2x8x1xf32>
    %377 = tpu.iota {dimensions = array<i32: 1>} : vector<1x8x1xi32>
    %c40_i32 = arith.constant 40 : i32
    %378 = vector.broadcast %c40_i32 : i32 to vector<1x8x1xi32>
    %379 = arith.addi %378, %377 : vector<1x8x1xi32>
    %380 = vector.broadcast %376 : vector<2x8x1xf32> to vector<2x8x128xf32>
    %381 = vector.broadcast %273 : vector<2x1x128xf32> to vector<2x8x128xf32>
    %382 = arith.cmpf ogt, %380, %381 : vector<2x8x128xf32>
    %383 = vector.broadcast %376 : vector<2x8x1xf32> to vector<2x8x128xf32>
    %384 = vector.broadcast %273 : vector<2x1x128xf32> to vector<2x8x128xf32>
    %385 = arith.cmpf oeq, %383, %384 : vector<2x8x128xf32>
    %386 = vector.broadcast %379 : vector<1x8x1xi32> to vector<1x8x128xi32>
    %387 = vector.broadcast %272 : vector<1x1x128xi32> to vector<1x8x128xi32>
    %388 = arith.cmpi slt, %386, %387 : vector<1x8x128xi32>
    %389 = vector.broadcast %388 : vector<1x8x128xi1> to vector<2x8x128xi1>
    %390 = arith.andi %385, %389 : vector<2x8x128xi1>
    %391 = arith.ori %382, %390 : vector<2x8x128xi1>
    %392 = arith.extui %391 : vector<2x8x128xi1> to vector<2x8x128xi32>
    %cst_97 = arith.constant dense<0> : vector<2x128xi32>
    %393 = vector.multi_reduction <add>, %392, %cst_97 [1] : vector<2x8x128xi32> to vector<2x128xi32>
    %394 = arith.addi %374, %393 : vector<2x128xi32>
    %395 = vector.extract_strided_slice %271 {offsets = [0, 48], sizes = [2, 8], strides = [1, 1]} : vector<2x128xf32> to vector<2x8xf32>
    %396 = vector.shape_cast %395 : vector<2x8xf32> to vector<2x8x1xf32>
    %397 = tpu.iota {dimensions = array<i32: 1>} : vector<1x8x1xi32>
    %c48_i32 = arith.constant 48 : i32
    %398 = vector.broadcast %c48_i32 : i32 to vector<1x8x1xi32>
    %399 = arith.addi %398, %397 : vector<1x8x1xi32>
    %400 = vector.broadcast %396 : vector<2x8x1xf32> to vector<2x8x128xf32>
    %401 = vector.broadcast %273 : vector<2x1x128xf32> to vector<2x8x128xf32>
    %402 = arith.cmpf ogt, %400, %401 : vector<2x8x128xf32>
    %403 = vector.broadcast %396 : vector<2x8x1xf32> to vector<2x8x128xf32>
    %404 = vector.broadcast %273 : vector<2x1x128xf32> to vector<2x8x128xf32>
    %405 = arith.cmpf oeq, %403, %404 : vector<2x8x128xf32>
    %406 = vector.broadcast %399 : vector<1x8x1xi32> to vector<1x8x128xi32>
    %407 = vector.broadcast %272 : vector<1x1x128xi32> to vector<1x8x128xi32>
    %408 = arith.cmpi slt, %406, %407 : vector<1x8x128xi32>
    %409 = vector.broadcast %408 : vector<1x8x128xi1> to vector<2x8x128xi1>
    %410 = arith.andi %405, %409 : vector<2x8x128xi1>
    %411 = arith.ori %402, %410 : vector<2x8x128xi1>
    %412 = arith.extui %411 : vector<2x8x128xi1> to vector<2x8x128xi32>
    %cst_98 = arith.constant dense<0> : vector<2x128xi32>
    %413 = vector.multi_reduction <add>, %412, %cst_98 [1] : vector<2x8x128xi32> to vector<2x128xi32>
    %414 = arith.addi %394, %413 : vector<2x128xi32>
    %415 = vector.extract_strided_slice %271 {offsets = [0, 56], sizes = [2, 8], strides = [1, 1]} : vector<2x128xf32> to vector<2x8xf32>
    %416 = vector.shape_cast %415 : vector<2x8xf32> to vector<2x8x1xf32>
    %417 = tpu.iota {dimensions = array<i32: 1>} : vector<1x8x1xi32>
    %c56_i32 = arith.constant 56 : i32
    %418 = vector.broadcast %c56_i32 : i32 to vector<1x8x1xi32>
    %419 = arith.addi %418, %417 : vector<1x8x1xi32>
    %420 = vector.broadcast %416 : vector<2x8x1xf32> to vector<2x8x128xf32>
    %421 = vector.broadcast %273 : vector<2x1x128xf32> to vector<2x8x128xf32>
    %422 = arith.cmpf ogt, %420, %421 : vector<2x8x128xf32>
    %423 = vector.broadcast %416 : vector<2x8x1xf32> to vector<2x8x128xf32>
    %424 = vector.broadcast %273 : vector<2x1x128xf32> to vector<2x8x128xf32>
    %425 = arith.cmpf oeq, %423, %424 : vector<2x8x128xf32>
    %426 = vector.broadcast %419 : vector<1x8x1xi32> to vector<1x8x128xi32>
    %427 = vector.broadcast %272 : vector<1x1x128xi32> to vector<1x8x128xi32>
    %428 = arith.cmpi slt, %426, %427 : vector<1x8x128xi32>
    %429 = vector.broadcast %428 : vector<1x8x128xi1> to vector<2x8x128xi1>
    %430 = arith.andi %425, %429 : vector<2x8x128xi1>
    %431 = arith.ori %422, %430 : vector<2x8x128xi1>
    %432 = arith.extui %431 : vector<2x8x128xi1> to vector<2x8x128xi32>
    %cst_99 = arith.constant dense<0> : vector<2x128xi32>
    %433 = vector.multi_reduction <add>, %432, %cst_99 [1] : vector<2x8x128xi32> to vector<2x128xi32>
    %434 = arith.addi %414, %433 : vector<2x128xi32>
    %435 = vector.extract_strided_slice %271 {offsets = [0, 64], sizes = [2, 8], strides = [1, 1]} : vector<2x128xf32> to vector<2x8xf32>
    %436 = vector.shape_cast %435 : vector<2x8xf32> to vector<2x8x1xf32>
    %437 = tpu.iota {dimensions = array<i32: 1>} : vector<1x8x1xi32>
    %c64_i32 = arith.constant 64 : i32
    %438 = vector.broadcast %c64_i32 : i32 to vector<1x8x1xi32>
    %439 = arith.addi %438, %437 : vector<1x8x1xi32>
    %440 = vector.broadcast %436 : vector<2x8x1xf32> to vector<2x8x128xf32>
    %441 = vector.broadcast %273 : vector<2x1x128xf32> to vector<2x8x128xf32>
    %442 = arith.cmpf ogt, %440, %441 : vector<2x8x128xf32>
    %443 = vector.broadcast %436 : vector<2x8x1xf32> to vector<2x8x128xf32>
    %444 = vector.broadcast %273 : vector<2x1x128xf32> to vector<2x8x128xf32>
    %445 = arith.cmpf oeq, %443, %444 : vector<2x8x128xf32>
    %446 = vector.broadcast %439 : vector<1x8x1xi32> to vector<1x8x128xi32>
    %447 = vector.broadcast %272 : vector<1x1x128xi32> to vector<1x8x128xi32>
    %448 = arith.cmpi slt, %446, %447 : vector<1x8x128xi32>
    %449 = vector.broadcast %448 : vector<1x8x128xi1> to vector<2x8x128xi1>
    %450 = arith.andi %445, %449 : vector<2x8x128xi1>
    %451 = arith.ori %442, %450 : vector<2x8x128xi1>
    %452 = arith.extui %451 : vector<2x8x128xi1> to vector<2x8x128xi32>
    %cst_100 = arith.constant dense<0> : vector<2x128xi32>
    %453 = vector.multi_reduction <add>, %452, %cst_100 [1] : vector<2x8x128xi32> to vector<2x128xi32>
    %454 = arith.addi %434, %453 : vector<2x128xi32>
    %455 = vector.extract_strided_slice %271 {offsets = [0, 72], sizes = [2, 8], strides = [1, 1]} : vector<2x128xf32> to vector<2x8xf32>
    %456 = vector.shape_cast %455 : vector<2x8xf32> to vector<2x8x1xf32>
    %457 = tpu.iota {dimensions = array<i32: 1>} : vector<1x8x1xi32>
    %c72_i32 = arith.constant 72 : i32
    %458 = vector.broadcast %c72_i32 : i32 to vector<1x8x1xi32>
    %459 = arith.addi %458, %457 : vector<1x8x1xi32>
    %460 = vector.broadcast %456 : vector<2x8x1xf32> to vector<2x8x128xf32>
    %461 = vector.broadcast %273 : vector<2x1x128xf32> to vector<2x8x128xf32>
    %462 = arith.cmpf ogt, %460, %461 : vector<2x8x128xf32>
    %463 = vector.broadcast %456 : vector<2x8x1xf32> to vector<2x8x128xf32>
    %464 = vector.broadcast %273 : vector<2x1x128xf32> to vector<2x8x128xf32>
    %465 = arith.cmpf oeq, %463, %464 : vector<2x8x128xf32>
    %466 = vector.broadcast %459 : vector<1x8x1xi32> to vector<1x8x128xi32>
    %467 = vector.broadcast %272 : vector<1x1x128xi32> to vector<1x8x128xi32>
    %468 = arith.cmpi slt, %466, %467 : vector<1x8x128xi32>
    %469 = vector.broadcast %468 : vector<1x8x128xi1> to vector<2x8x128xi1>
    %470 = arith.andi %465, %469 : vector<2x8x128xi1>
    %471 = arith.ori %462, %470 : vector<2x8x128xi1>
    %472 = arith.extui %471 : vector<2x8x128xi1> to vector<2x8x128xi32>
    %cst_101 = arith.constant dense<0> : vector<2x128xi32>
    %473 = vector.multi_reduction <add>, %472, %cst_101 [1] : vector<2x8x128xi32> to vector<2x128xi32>
    %474 = arith.addi %454, %473 : vector<2x128xi32>
    %475 = vector.extract_strided_slice %271 {offsets = [0, 80], sizes = [2, 8], strides = [1, 1]} : vector<2x128xf32> to vector<2x8xf32>
    %476 = vector.shape_cast %475 : vector<2x8xf32> to vector<2x8x1xf32>
    %477 = tpu.iota {dimensions = array<i32: 1>} : vector<1x8x1xi32>
    %c80_i32 = arith.constant 80 : i32
    %478 = vector.broadcast %c80_i32 : i32 to vector<1x8x1xi32>
    %479 = arith.addi %478, %477 : vector<1x8x1xi32>
    %480 = vector.broadcast %476 : vector<2x8x1xf32> to vector<2x8x128xf32>
    %481 = vector.broadcast %273 : vector<2x1x128xf32> to vector<2x8x128xf32>
    %482 = arith.cmpf ogt, %480, %481 : vector<2x8x128xf32>
    %483 = vector.broadcast %476 : vector<2x8x1xf32> to vector<2x8x128xf32>
    %484 = vector.broadcast %273 : vector<2x1x128xf32> to vector<2x8x128xf32>
    %485 = arith.cmpf oeq, %483, %484 : vector<2x8x128xf32>
    %486 = vector.broadcast %479 : vector<1x8x1xi32> to vector<1x8x128xi32>
    %487 = vector.broadcast %272 : vector<1x1x128xi32> to vector<1x8x128xi32>
    %488 = arith.cmpi slt, %486, %487 : vector<1x8x128xi32>
    %489 = vector.broadcast %488 : vector<1x8x128xi1> to vector<2x8x128xi1>
    %490 = arith.andi %485, %489 : vector<2x8x128xi1>
    %491 = arith.ori %482, %490 : vector<2x8x128xi1>
    %492 = arith.extui %491 : vector<2x8x128xi1> to vector<2x8x128xi32>
    %cst_102 = arith.constant dense<0> : vector<2x128xi32>
    %493 = vector.multi_reduction <add>, %492, %cst_102 [1] : vector<2x8x128xi32> to vector<2x128xi32>
    %494 = arith.addi %474, %493 : vector<2x128xi32>
    %495 = vector.extract_strided_slice %271 {offsets = [0, 88], sizes = [2, 8], strides = [1, 1]} : vector<2x128xf32> to vector<2x8xf32>
    %496 = vector.shape_cast %495 : vector<2x8xf32> to vector<2x8x1xf32>
    %497 = tpu.iota {dimensions = array<i32: 1>} : vector<1x8x1xi32>
    %c88_i32 = arith.constant 88 : i32
    %498 = vector.broadcast %c88_i32 : i32 to vector<1x8x1xi32>
    %499 = arith.addi %498, %497 : vector<1x8x1xi32>
    %500 = vector.broadcast %496 : vector<2x8x1xf32> to vector<2x8x128xf32>
    %501 = vector.broadcast %273 : vector<2x1x128xf32> to vector<2x8x128xf32>
    %502 = arith.cmpf ogt, %500, %501 : vector<2x8x128xf32>
    %503 = vector.broadcast %496 : vector<2x8x1xf32> to vector<2x8x128xf32>
    %504 = vector.broadcast %273 : vector<2x1x128xf32> to vector<2x8x128xf32>
    %505 = arith.cmpf oeq, %503, %504 : vector<2x8x128xf32>
    %506 = vector.broadcast %499 : vector<1x8x1xi32> to vector<1x8x128xi32>
    %507 = vector.broadcast %272 : vector<1x1x128xi32> to vector<1x8x128xi32>
    %508 = arith.cmpi slt, %506, %507 : vector<1x8x128xi32>
    %509 = vector.broadcast %508 : vector<1x8x128xi1> to vector<2x8x128xi1>
    %510 = arith.andi %505, %509 : vector<2x8x128xi1>
    %511 = arith.ori %502, %510 : vector<2x8x128xi1>
    %512 = arith.extui %511 : vector<2x8x128xi1> to vector<2x8x128xi32>
    %cst_103 = arith.constant dense<0> : vector<2x128xi32>
    %513 = vector.multi_reduction <add>, %512, %cst_103 [1] : vector<2x8x128xi32> to vector<2x128xi32>
    %514 = arith.addi %494, %513 : vector<2x128xi32>
    %515 = vector.extract_strided_slice %271 {offsets = [0, 96], sizes = [2, 8], strides = [1, 1]} : vector<2x128xf32> to vector<2x8xf32>
    %516 = vector.shape_cast %515 : vector<2x8xf32> to vector<2x8x1xf32>
    %517 = tpu.iota {dimensions = array<i32: 1>} : vector<1x8x1xi32>
    %c96_i32 = arith.constant 96 : i32
    %518 = vector.broadcast %c96_i32 : i32 to vector<1x8x1xi32>
    %519 = arith.addi %518, %517 : vector<1x8x1xi32>
    %520 = vector.broadcast %516 : vector<2x8x1xf32> to vector<2x8x128xf32>
    %521 = vector.broadcast %273 : vector<2x1x128xf32> to vector<2x8x128xf32>
    %522 = arith.cmpf ogt, %520, %521 : vector<2x8x128xf32>
    %523 = vector.broadcast %516 : vector<2x8x1xf32> to vector<2x8x128xf32>
    %524 = vector.broadcast %273 : vector<2x1x128xf32> to vector<2x8x128xf32>
    %525 = arith.cmpf oeq, %523, %524 : vector<2x8x128xf32>
    %526 = vector.broadcast %519 : vector<1x8x1xi32> to vector<1x8x128xi32>
    %527 = vector.broadcast %272 : vector<1x1x128xi32> to vector<1x8x128xi32>
    %528 = arith.cmpi slt, %526, %527 : vector<1x8x128xi32>
    %529 = vector.broadcast %528 : vector<1x8x128xi1> to vector<2x8x128xi1>
    %530 = arith.andi %525, %529 : vector<2x8x128xi1>
    %531 = arith.ori %522, %530 : vector<2x8x128xi1>
    %532 = arith.extui %531 : vector<2x8x128xi1> to vector<2x8x128xi32>
    %cst_104 = arith.constant dense<0> : vector<2x128xi32>
    %533 = vector.multi_reduction <add>, %532, %cst_104 [1] : vector<2x8x128xi32> to vector<2x128xi32>
    %534 = arith.addi %514, %533 : vector<2x128xi32>
    %535 = vector.extract_strided_slice %271 {offsets = [0, 104], sizes = [2, 8], strides = [1, 1]} : vector<2x128xf32> to vector<2x8xf32>
    %536 = vector.shape_cast %535 : vector<2x8xf32> to vector<2x8x1xf32>
    %537 = tpu.iota {dimensions = array<i32: 1>} : vector<1x8x1xi32>
    %c104_i32 = arith.constant 104 : i32
    %538 = vector.broadcast %c104_i32 : i32 to vector<1x8x1xi32>
    %539 = arith.addi %538, %537 : vector<1x8x1xi32>
    %540 = vector.broadcast %536 : vector<2x8x1xf32> to vector<2x8x128xf32>
    %541 = vector.broadcast %273 : vector<2x1x128xf32> to vector<2x8x128xf32>
    %542 = arith.cmpf ogt, %540, %541 : vector<2x8x128xf32>
    %543 = vector.broadcast %536 : vector<2x8x1xf32> to vector<2x8x128xf32>
    %544 = vector.broadcast %273 : vector<2x1x128xf32> to vector<2x8x128xf32>
    %545 = arith.cmpf oeq, %543, %544 : vector<2x8x128xf32>
    %546 = vector.broadcast %539 : vector<1x8x1xi32> to vector<1x8x128xi32>
    %547 = vector.broadcast %272 : vector<1x1x128xi32> to vector<1x8x128xi32>
    %548 = arith.cmpi slt, %546, %547 : vector<1x8x128xi32>
    %549 = vector.broadcast %548 : vector<1x8x128xi1> to vector<2x8x128xi1>
    %550 = arith.andi %545, %549 : vector<2x8x128xi1>
    %551 = arith.ori %542, %550 : vector<2x8x128xi1>
    %552 = arith.extui %551 : vector<2x8x128xi1> to vector<2x8x128xi32>
    %cst_105 = arith.constant dense<0> : vector<2x128xi32>
    %553 = vector.multi_reduction <add>, %552, %cst_105 [1] : vector<2x8x128xi32> to vector<2x128xi32>
    %554 = arith.addi %534, %553 : vector<2x128xi32>
    %555 = vector.extract_strided_slice %271 {offsets = [0, 112], sizes = [2, 8], strides = [1, 1]} : vector<2x128xf32> to vector<2x8xf32>
    %556 = vector.shape_cast %555 : vector<2x8xf32> to vector<2x8x1xf32>
    %557 = tpu.iota {dimensions = array<i32: 1>} : vector<1x8x1xi32>
    %c112_i32 = arith.constant 112 : i32
    %558 = vector.broadcast %c112_i32 : i32 to vector<1x8x1xi32>
    %559 = arith.addi %558, %557 : vector<1x8x1xi32>
    %560 = vector.broadcast %556 : vector<2x8x1xf32> to vector<2x8x128xf32>
    %561 = vector.broadcast %273 : vector<2x1x128xf32> to vector<2x8x128xf32>
    %562 = arith.cmpf ogt, %560, %561 : vector<2x8x128xf32>
    %563 = vector.broadcast %556 : vector<2x8x1xf32> to vector<2x8x128xf32>
    %564 = vector.broadcast %273 : vector<2x1x128xf32> to vector<2x8x128xf32>
    %565 = arith.cmpf oeq, %563, %564 : vector<2x8x128xf32>
    %566 = vector.broadcast %559 : vector<1x8x1xi32> to vector<1x8x128xi32>
    %567 = vector.broadcast %272 : vector<1x1x128xi32> to vector<1x8x128xi32>
    %568 = arith.cmpi slt, %566, %567 : vector<1x8x128xi32>
    %569 = vector.broadcast %568 : vector<1x8x128xi1> to vector<2x8x128xi1>
    %570 = arith.andi %565, %569 : vector<2x8x128xi1>
    %571 = arith.ori %562, %570 : vector<2x8x128xi1>
    %572 = arith.extui %571 : vector<2x8x128xi1> to vector<2x8x128xi32>
    %cst_106 = arith.constant dense<0> : vector<2x128xi32>
    %573 = vector.multi_reduction <add>, %572, %cst_106 [1] : vector<2x8x128xi32> to vector<2x128xi32>
    %574 = arith.addi %554, %573 : vector<2x128xi32>
    %575 = vector.extract_strided_slice %271 {offsets = [0, 120], sizes = [2, 8], strides = [1, 1]} : vector<2x128xf32> to vector<2x8xf32>
    %576 = vector.shape_cast %575 : vector<2x8xf32> to vector<2x8x1xf32>
    %577 = tpu.iota {dimensions = array<i32: 1>} : vector<1x8x1xi32>
    %c120_i32 = arith.constant 120 : i32
    %578 = vector.broadcast %c120_i32 : i32 to vector<1x8x1xi32>
    %579 = arith.addi %578, %577 : vector<1x8x1xi32>
    %580 = vector.broadcast %576 : vector<2x8x1xf32> to vector<2x8x128xf32>
    %581 = vector.broadcast %273 : vector<2x1x128xf32> to vector<2x8x128xf32>
    %582 = arith.cmpf ogt, %580, %581 : vector<2x8x128xf32>
    %583 = vector.broadcast %576 : vector<2x8x1xf32> to vector<2x8x128xf32>
    %584 = vector.broadcast %273 : vector<2x1x128xf32> to vector<2x8x128xf32>
    %585 = arith.cmpf oeq, %583, %584 : vector<2x8x128xf32>
    %586 = vector.broadcast %579 : vector<1x8x1xi32> to vector<1x8x128xi32>
    %587 = vector.broadcast %272 : vector<1x1x128xi32> to vector<1x8x128xi32>
    %588 = arith.cmpi slt, %586, %587 : vector<1x8x128xi32>
    %589 = vector.broadcast %588 : vector<1x8x128xi1> to vector<2x8x128xi1>
    %590 = arith.andi %585, %589 : vector<2x8x128xi1>
    %591 = arith.ori %582, %590 : vector<2x8x128xi1>
    %592 = arith.extui %591 : vector<2x8x128xi1> to vector<2x8x128xi32>
    %cst_107 = arith.constant dense<0> : vector<2x128xi32>
    %593 = vector.multi_reduction <add>, %592, %cst_107 [1] : vector<2x8x128xi32> to vector<2x128xi32>
    %594 = arith.addi %574, %593 : vector<2x128xi32>
    %595 = arith.extui %132 : vector<2x128xi1> to vector<2x128xi32>
    %cst_108 = arith.constant dense<0> : vector<2xi32>
    %596 = vector.multi_reduction <add>, %595, %cst_108 [1] : vector<2x128xi32> to vector<2xi32>
    %597 = vector.shape_cast %596 : vector<2xi32> to vector<2x1xi32>
    %c3_i32_109 = arith.constant 3 : i32
    %598 = vector.broadcast %c3_i32_109 : i32 to vector<2x1xi32>
    %599 = arith.muli %598, %597 : vector<2x1xi32>
    %c127_i32 = arith.constant 127 : i32
    %600 = vector.broadcast %c127_i32 : i32 to vector<2x1xi32>
    %601 = arith.minsi %599, %600 : vector<2x1xi32>
    %602 = vector.broadcast %601 : vector<2x1xi32> to vector<2x128xi32>
    %603 = arith.cmpi slt, %594, %602 : vector<2x128xi32>
    %604 = arith.ori %132, %603 : vector<2x128xi1>
    %cst_110 = arith.constant 0.000000e+00 : f32
    %605 = vector.broadcast %cst_110 : f32 to vector<2x128xf32>
    %606 = arith.select %604, %269, %605 : vector<2x128xi1>, vector<2x128xf32>
    %cst_111 = arith.constant dense<0.000000e+00> : vector<2xf32>
    %607 = vector.multi_reduction <add>, %606, %cst_111 [1] : vector<2x128xf32> to vector<2xf32>
    %608 = vector.shape_cast %607 : vector<2xf32> to vector<2x1xf32>
    %c2_i32_112 = arith.constant 2 : i32
    %609 = arith.muli %arg0, %c2_i32_112 : i32
    %610 = tpu.iota {dimensions = array<i32: 0>} : vector<2x1xi32>
    %611 = vector.broadcast %609 : i32 to vector<2x1xi32>
    %612 = arith.addi %611, %610 : vector<2x1xi32>
    %c2_i32_113 = arith.constant 2 : i32
    %613 = vector.broadcast %c2_i32_113 : i32 to vector<2x1xi32>
    %614 = arith.cmpi slt, %612, %613 : vector<2x1xi32>
    %cst_114 = arith.constant 0.000000e+00 : f32
    %615 = vector.broadcast %cst_114 : f32 to vector<2x1xf32>
    %616 = arith.select %614, %221, %615 : vector<2x1xi1>, vector<2x1xf32>
    %cst_115 = arith.constant 0.000000e+00 : f32
    %617 = vector.broadcast %cst_115 : f32 to vector<2x1xf32>
    %618 = arith.select %614, %608, %617 : vector<2x1xi1>, vector<2x1xf32>
    %619 = arith.sitofp %597 : vector<2x1xi32> to vector<2x1xf32>
    %cst_116 = arith.constant 0.000000e+00 : f32
    %620 = vector.broadcast %cst_116 : f32 to vector<2x1xf32>
    %621 = arith.select %614, %619, %620 : vector<2x1xi1>, vector<2x1xf32>
    %622 = tpu.iota {dimensions = array<i32: 2>} : vector<1x1x128xi32>
    %c0_i32_117 = arith.constant 0 : i32
    %623 = vector.broadcast %c0_i32_117 : i32 to vector<1x1x128xi32>
    %624 = arith.cmpi eq, %622, %623 : vector<1x1x128xi32>
    %625 = vector.shape_cast %616 : vector<2x1xf32> to vector<2x1x1xf32>
    %c1_i32_118 = arith.constant 1 : i32
    %626 = vector.broadcast %c1_i32_118 : i32 to vector<1x1x128xi32>
    %627 = arith.cmpi eq, %622, %626 : vector<1x1x128xi32>
    %628 = vector.shape_cast %618 : vector<2x1xf32> to vector<2x1x1xf32>
    %c2_i32_119 = arith.constant 2 : i32
    %629 = vector.broadcast %c2_i32_119 : i32 to vector<1x1x128xi32>
    %630 = arith.cmpi eq, %622, %629 : vector<1x1x128xi32>
    %631 = vector.shape_cast %621 : vector<2x1xf32> to vector<2x1x1xf32>
    %cst_120 = arith.constant 0.000000e+00 : f32
    %632 = vector.shape_cast %630 : vector<1x1x128xi1> to vector<1x1x128xi1>
    %633 = vector.broadcast %632 : vector<1x1x128xi1> to vector<2x1x128xi1>
    %634 = vector.shape_cast %631 : vector<2x1x1xf32> to vector<2x1x1xf32>
    %635 = vector.broadcast %634 : vector<2x1x1xf32> to vector<2x1x128xf32>
    %636 = vector.broadcast %cst_120 : f32 to vector<2x1x128xf32>
    %637 = arith.select %633, %635, %636 : vector<2x1x128xi1>, vector<2x1x128xf32>
    %638 = vector.shape_cast %627 : vector<1x1x128xi1> to vector<1x1x128xi1>
    %639 = vector.broadcast %638 : vector<1x1x128xi1> to vector<2x1x128xi1>
    %640 = vector.shape_cast %628 : vector<2x1x1xf32> to vector<2x1x1xf32>
    %641 = vector.broadcast %640 : vector<2x1x1xf32> to vector<2x1x128xf32>
    %642 = arith.select %639, %641, %637 : vector<2x1x128xi1>, vector<2x1x128xf32>
    %643 = vector.shape_cast %624 : vector<1x1x128xi1> to vector<1x1x128xi1>
    %644 = vector.broadcast %643 : vector<1x1x128xi1> to vector<2x1x128xi1>
    %645 = vector.shape_cast %625 : vector<2x1x1xf32> to vector<2x1x1xf32>
    %646 = vector.broadcast %645 : vector<2x1x1xf32> to vector<2x1x128xf32>
    %647 = arith.select %644, %646, %642 : vector<2x1x128xi1>, vector<2x1x128xf32>
    %c0_121 = arith.constant 0 : index
    %c0_122 = arith.constant 0 : index
    %c0_123 = arith.constant 0 : index
    %648 = vector.load %arg6[%c0_121, %c0_122, %c0_123] : memref<2x1x128xf32, #tpu.memory_space<vmem>>, vector<2x1x128xf32>
    tpu.vector_store %arg6[%c0_121, %c0_122, %c0_123], %647 {strides = array<i32>} : memref<2x1x128xf32, #tpu.memory_space<vmem>>, vector<2x1x128xf32>,
    return
  }
  func.func @transform_0(%arg0: i32) -> (i32, i32, i32) {
    %c0_i32 = arith.constant 0 : i32
    %c0_i32_0 = arith.constant 0 : i32
    %c0_i32_1 = arith.constant 0 : i32
    return %c0_i32, %arg0, %c0_i32_0 : i32, i32, i32
  }
  func.func @transform_1(%arg0: i32) -> (i32, i32, i32) {
    %c0_i32 = arith.constant 0 : i32
    %c0_i32_0 = arith.constant 0 : i32
    %c0_i32_1 = arith.constant 0 : i32
    return %c0_i32, %arg0, %c0_i32_0 : i32, i32, i32
  }
  func.func @transform_2(%arg0: i32) -> (i32, i32) {
    %c0_i32 = arith.constant 0 : i32
    %c0_i32_0 = arith.constant 0 : i32
    %c0_i32_1 = arith.constant 0 : i32
    return %c0_i32, %c0_i32_0 : i32, i32
  }
  func.func @transform_3(%arg0: i32) -> (i32, i32, i32) {
    %c0_i32 = arith.constant 0 : i32
    %c0_i32_0 = arith.constant 0 : i32
    %c0_i32_1 = arith.constant 0 : i32
    return %arg0, %c0_i32, %c0_i32_0 : i32, i32, i32
  }
  func.func @transform_4(%arg0: i32) -> (i32, i32, i32) {
    %c0_i32 = arith.constant 0 : i32
    %c0_i32_0 = arith.constant 0 : i32
    %c0_i32_1 = arith.constant 0 : i32
    return %arg0, %c0_i32, %c0_i32_0 : i32, i32, i32
  }
  func.func @transform_5(%arg0: i32) -> (i32, i32, i32) {
    %c0_i32 = arith.constant 0 : i32
    %c0_i32_0 = arith.constant 0 : i32
    %c0_i32_1 = arith.constant 0 : i32
    return %arg0, %c0_i32, %c0_i32_0 : i32, i32, i32
  }
}

</mosaic_0001>

<llo_original>
// kernel: tpu_custom_call.1
$region0: #{tpu_custom_call.1}
  #allocation0 [shape = 'u32[]', space=smem, size = 0x4, offset = 0x4, fixed_abs, tag = 'smem constant byte address 0x4 - core index']
  #allocation1 [shape = 'u32[144,128]{1,0:T(1,128)}', space=vmem, size = 0x12000, scoped, tag = 'internal scratch']
  %s0 = inlined_call_operand.vmem [shape: f32[4,2,128], index: 0, kind: input, shape index: {}]
  %s1 = inlined_call_operand.vmem [shape: f32[4,2,128], index: 1, kind: input, shape index: {}]
  %s2 = inlined_call_operand.vmem [shape: f32[4,128], index: 2, kind: input, shape index: {}]
  %s3 = inlined_call_operand.vmem [shape: f32[2,8,4], index: 3, kind: input, shape index: {}]
  %s4 = inlined_call_operand.vmem [shape: s32[2,8,1], index: 4, kind: input, shape index: {}]
  %s5 = inlined_call_operand.hbm [shape: f32[2,1,128], index: 5, kind: output, shape index: {}]
  %s6 = sld [smem:[#allocation0]]
  $region30: #{tpu_custom_call.1} parent=0
    _
  %s8 = ssub.s32 1, %s6
  %s9 = scalar_select 0, %s8, %s6
  $region1: #{tpu_custom_call.1} parent=0
    #allocation2 [shape = 'u8[1024]{0}', space=vmem, size = 0x400, scoped, tag = 'output window, operand 0, single buffered']
    #allocation3 [shape = 's32[1]{0}', space=sflag, size = 0x4, scoped, tag = 'scoped memory for tpu_custom_call.1']
    %10 = vsyncpa [#allocation3], 0
    // Predicated region
    $region2: #{tpu_custom_call.1} parent=1 // pred_check
      _
    $region3: #{tpu_custom_call.1} parent=1 // pred_check_branch
      %12 = sbr.rel (0) target = $region5
    $region4: #{tpu_custom_call.1} parent=1 // pred_region
      _
    $region5: #{tpu_custom_call.1} parent=1 // pred_fallthru
      _
    // Predicated region
    $region6: #{tpu_custom_call.1} parent=1 // pred_check
      _
    $region7: #{tpu_custom_call.1} parent=1 // pred_check_branch
      %14 = sbr.rel (0) target = $region9
    $region8: #{tpu_custom_call.1} parent=1 // pred_region
      _
    $region9: #{tpu_custom_call.1} parent=1 // pred_fallthru
      _
    // Predicated region
    $region10: #{tpu_custom_call.1} parent=1 // pred_check
      _
    $region11: #{tpu_custom_call.1} parent=1 // pred_check_branch
      %16 = sbr.rel (0) target = $region13
    $region12: #{tpu_custom_call.1} parent=1 // pred_region
      _
    $region13: #{tpu_custom_call.1} parent=1 // pred_fallthru
      _
    // Predicated region
    $region14: #{tpu_custom_call.1} parent=1 // pred_check
      _
    $region15: #{tpu_custom_call.1} parent=1 // pred_check_branch
      %18 = sbr.rel (0) target = $region17
    $region16: #{tpu_custom_call.1} parent=1 // pred_region
      _
    $region17: #{tpu_custom_call.1} parent=1 // pred_fallthru
      _
    // Predicated region
    $region18: #{tpu_custom_call.1} parent=1 // pred_check
      _
    $region19: #{tpu_custom_call.1} parent=1 // pred_check_branch
      %20 = sbr.rel (0) target = $region21
    $region20: #{tpu_custom_call.1} parent=1 // pred_region
      _
    $region21: #{tpu_custom_call.1} parent=1 // pred_fallthru
      _
    %v21 = vld [vmem:[%s2] sm:$0x1]
    %v22 = vld [vmem:[%s2 + $0x1] sm:$0x1]
    %v23 = vld [vmem:[%s2 + $0x2] sm:$0x1]
    %v24 = vld [vmem:[%s2 + $0x3] sm:$0x1]
    %v25 = vmul.f32 %v23, 0.5
    %v26 = vsub.f32 %v21, %v25
    %v27 = vmul.f32 %v24, 0.5
    %v28 = vsub.f32 %v22, %v27
    %v29 = vadd.f32 %v21, %v25
    %v30 = vadd.f32 %v22, %v27
    %v31 = vld [vmem:[%s3] sm:$0xff]
    %v32 = vld [vmem:[%s3 + $0x8] sm:$0xff]
    %34 = vset.pattern.permute.xlu0 2
    %35 = vperm.xlu0 %34, %v31
    %v36 = vpop.permute.xlu0 %35
    %39 = vset.pattern.permute.xlu0 2
    %40 = vperm.xlu0 %39, %v32
    %v41 = vpop.permute.xlu0 %40
    %v43 = vlaneseq
    %v44 = vshrl.u32 %v43, 7
    %v45 = vsub.s32 0, %v44
    %v46 = vrot.slane %v29, %v45
    %v47 = vmin.f32 %v36, %v46
    %v48 = vmin.f32 %v41, %v46
    %49 = vset.pattern.permute.xlu0 0
    %50 = vperm.xlu0 %49, %v31
    %v51 = vpop.permute.xlu0 %50
    %53 = vset.pattern.permute.xlu0 0
    %54 = vperm.xlu0 %53, %v32
    %v55 = vpop.permute.xlu0 %54
    %v57 = vlaneseq
    %v58 = vshrl.u32 %v57, 7
    %v59 = vsub.s32 0, %v58
    %v60 = vrot.slane %v26, %v59
    %v61 = vmax.f32 %v51, %v60
    %v62 = vmax.f32 %v55, %v60
    %v63 = vsub.f32 %v47, %v61
    %v64 = vsub.f32 %v48, %v62
    %v65 = vmax.f32 %v63, 0.0
    %v66 = vmax.f32 %v64, 0.0
    %67 = vset.pattern.permute.xlu0 3
    %68 = vperm.xlu0 %67, %v31
    %v69 = vpop.permute.xlu0 %68
    %71 = vset.pattern.permute.xlu0 3
    %72 = vperm.xlu0 %71, %v32
    %v73 = vpop.permute.xlu0 %72
    %v75 = vlaneseq
    %v76 = vshrl.u32 %v75, 7
    %v77 = vsub.s32 0, %v76
    %v78 = vrot.slane %v30, %v77
    %v79 = vmin.f32 %v69, %v78
    %v80 = vmin.f32 %v73, %v78
    %81 = vset.pattern.permute.xlu0 1
    %82 = vperm.xlu0 %81, %v31
    %v83 = vpop.permute.xlu0 %82
    %85 = vset.pattern.permute.xlu0 1
    %86 = vperm.xlu0 %85, %v32
    %v87 = vpop.permute.xlu0 %86
    %v89 = vlaneseq
    %v90 = vshrl.u32 %v89, 7
    %v91 = vsub.s32 0, %v90
    %v92 = vrot.slane %v28, %v91
    %v93 = vmax.f32 %v83, %v92
    %v94 = vmax.f32 %v87, %v92
    %v95 = vsub.f32 %v79, %v93
    %v96 = vsub.f32 %v80, %v94
    %v97 = vmax.f32 %v95, 0.0
    %v98 = vmax.f32 %v96, 0.0
    %v99 = vmul.f32 %v65, %v97
    %v100 = vmul.f32 %v66, %v98
    %101 = vrot.lane.b32.xlu0 %v31, 2
    %v102 = vpop.permute.xlu0 %101
    %103 = vrot.lane.b32.xlu0 %v32, 2
    %v104 = vpop.permute.xlu0 %103
    %v107 = vsub.f32 %v31, %v102
    %v108 = vsub.f32 %v32, %v104
    %111 = vrot.lane.b32.xlu0 %v107, 127
    %v112 = vpop.permute.xlu0 %111
    %113 = vrot.lane.b32.xlu0 %v108, 127
    %v114 = vpop.permute.xlu0 %113
    %v117 = vmul.f32 %v107, %v112
    %v118 = vmul.f32 %v108, %v114
    %v119 = vsub.f32 %v29, %v26
    %v120 = vsub.f32 %v30, %v28
    %v121 = vmul.f32 %v119, %v120
    %123 = vset.pattern.permute.xlu0 2
    %124 = vperm.xlu0 %123, %v117
    %v125 = vpop.permute.xlu0 %124
    %128 = vset.pattern.permute.xlu0 2
    %129 = vperm.xlu0 %128, %v118
    %v130 = vpop.permute.xlu0 %129
    %v132 = vlaneseq
    %v133 = vshrl.u32 %v132, 7
    %v134 = vsub.s32 0, %v133
    %v135 = vrot.slane %v121, %v134
    %v136 = vadd.f32 %v125, %v135
    %v137 = vadd.f32 %v130, %v135
    %v138 = vsub.f32 %v136, %v99
    %v139 = vsub.f32 %v137, %v100
    %v140 = vrcp.pop %v138
    %v141 = vmul.f32 %v99, %v140
    %v142 = vrcp.pop %v139
    %v143 = vmul.f32 %v100, %v142
    %144 = vmax.xlane.f32.xlu0 %v141
    %v145 = vpop.xlane.xlu0 %144
    %146 = vmax.xlane.f32.xlu0 %v143
    %v147 = vpop.xlane.xlu0 %146
    %v148 = vlaneseq
    %v149 = vand.u32 %v148, 127
    %vm150 = vcmp.eq.f32.partialorder %v141, %v145
    %vm151 = vcmp.eq.f32.partialorder %v143, %v147
    %v152 = vsel %vm150, %v149, 128
    %v153 = vsel %vm151, %v149, 128
    %v154 = vand.u32 %v152, 65535
    %v155 = vshra.s32 %v152, 16
    %v156 = vcvt.s32.f32 %v154
    %v157 = vcvt.s32.f32 %v155
    %158 = vmin.xlane.f32.xlu0 %v157
    %v159 = vpop.xlane.xlu0 %158
    %vm160 = vcmp.eq.f32.partialorder %v157, %v159
    %v161 = vsel %vm160, %v156, inf
    %162 = vmin.xlane.f32.xlu0 %v161
    %v163 = vpop.xlane.xlu0 %162
    %v164 = vcvt.f32.s32 %v163
    %v165 = vcvt.f32.s32 %v159
    %v166 = vshll.u32 %v165, 16
    %v167 = vadd.s32 %v166, %v164
    %v168 = vand.u32 %v153, 65535
    %v169 = vshra.s32 %v153, 16
    %v170 = vcvt.s32.f32 %v168
    %v171 = vcvt.s32.f32 %v169
    %172 = vmin.xlane.f32.xlu0 %v171
    %v173 = vpop.xlane.xlu0 %172
    %vm174 = vcmp.eq.f32.partialorder %v171, %v173
    %v175 = vsel %vm174, %v170, inf
    %176 = vmin.xlane.f32.xlu0 %v175
    %v177 = vpop.xlane.xlu0 %176
    %v178 = vcvt.f32.s32 %v177
    %v179 = vcvt.f32.s32 %v173
    %v180 = vshll.u32 %v179, 16
    %v181 = vadd.s32 %v180, %v178
    %v182 = vrot.slane %v141, 4
    %v183 = vmax.f32 %v141, %v182
    %v184 = vrot.slane %v183, 2
    %v185 = vmax.f32 %v183, %v184
    %v186 = vrot.slane %v185, 1
    %v187 = vmax.f32 %v185, %v186
    %v188 = vrot.slane %v143, 4
    %v189 = vmax.f32 %v143, %v188
    %v190 = vrot.slane %v189, 2
    %v191 = vmax.f32 %v189, %v190
    %v192 = vrot.slane %v191, 1
    %v193 = vmax.f32 %v191, %v192
    %v194 = vlaneseq
    %v195 = vshrl.u32 %v194, 7
    %vm196 = vcmp.eq.f32.partialorder %v141, %v187
    %vm197 = vcmp.eq.f32.partialorder %v143, %v193
    %v198 = vsel %vm196, %v195, 8
    %v199 = vsel %vm197, %v195, 8
    %v200 = vrot.slane %v198, 4
    %vm201 = vcmp.lt.s32.totalorder %v198, %v200
    %v202 = vsel %vm201, %v198, %v200
    %v203 = vrot.slane %v202, 2
    %vm204 = vcmp.lt.s32.totalorder %v202, %v203
    %v205 = vsel %vm204, %v202, %v203
    %v206 = vrot.slane %v205, 1
    %vm207 = vcmp.lt.s32.totalorder %v205, %v206
    %v208 = vsel %vm207, %v205, %v206
    %v209 = vrot.slane %v199, 4
    %vm210 = vcmp.lt.s32.totalorder %v199, %v209
    %v211 = vsel %vm210, %v199, %v209
    %v212 = vrot.slane %v211, 2
    %vm213 = vcmp.lt.s32.totalorder %v211, %v212
    %v214 = vsel %vm213, %v211, %v212
    %v215 = vrot.slane %v214, 1
    %vm216 = vcmp.lt.s32.totalorder %v214, %v215
    %v217 = vsel %vm216, %v214, %v215
    %vm218 = vcmp.eq.s32.totalorder %v167, %v149
    %vm219 = vcmp.eq.s32.totalorder %v181, %v149
    %v220 = vsel %vm218, 1.0, 0.0
    %v221 = vsel %vm219, 1.0, 0.0
    %v222 = vrot.slane %v220, 4
    %v223 = vmax.f32 %v220, %v222
    %v224 = vrot.slane %v223, 2
    %v225 = vmax.f32 %v223, %v224
    %v226 = vrot.slane %v225, 1
    %v227 = vmax.f32 %v225, %v226
    %v228 = vrot.slane %v221, 4
    %v229 = vmax.f32 %v221, %v228
    %v230 = vrot.slane %v229, 2
    %v231 = vmax.f32 %v229, %v230
    %v232 = vrot.slane %v231, 1
    %v233 = vmax.f32 %v231, %v232
    %vm234 = vcmp.gt.f32.partialorder %v227, 0.0
    %vm235 = vcmp.gt.f32.partialorder %v233, 0.0
    %v236 = vsel %vm218, %v195, 4294967295
    %v237 = vsel %vm219, %v195, 4294967295
    %v238 = vrot.slane %v236, 4
    %vm239 = vcmp.gt.s32.totalorder %v236, %v238
    %v240 = vsel %vm239, %v236, %v238
    %v241 = vrot.slane %v240, 2
    %vm242 = vcmp.gt.s32.totalorder %v240, %v241
    %v243 = vsel %vm242, %v240, %v241
    %v244 = vrot.slane %v243, 1
    %vm245 = vcmp.gt.s32.totalorder %v243, %v244
    %v246 = vsel %vm245, %v243, %v244
    %v247 = vrot.slane %v237, 4
    %vm248 = vcmp.gt.s32.totalorder %v237, %v247
    %v249 = vsel %vm248, %v237, %v247
    %v250 = vrot.slane %v249, 2
    %vm251 = vcmp.gt.s32.totalorder %v249, %v250
    %v252 = vsel %vm251, %v249, %v250
    %v253 = vrot.slane %v252, 1
    %vm254 = vcmp.gt.s32.totalorder %v252, %v253
    %v255 = vsel %vm254, %v252, %v253
    %v256 = vsel %vm234, 2.0, %v187
    %v257 = vsel %vm235, 2.0, %v193
    %v258 = vsel %vm234, %v246, %v208
    %v259 = vsel %vm235, %v255, %v217
    %vm260 = vcmp.eq.s32.totalorder %v258, %v195
    %vm261 = vcmp.eq.s32.totalorder %v259, %v195
    %v262 = vsel %vm260, 1, 0
    %v263 = vsel %vm261, 1, 0
    %v264 = vcvt.s32.f32 %v262
    %v265 = vcvt.s32.f32 %v263
    %v266 = vmul.f32 %v264, %v51
    %v267 = vmul.f32 %v265, %v55
    %v268 = vrot.slane %v266, 4
    %v269 = vadd.f32 %v266, %v268
    %v270 = vrot.slane %v269, 2
    %v271 = vadd.f32 %v269, %v270
    %v272 = vrot.slane %v271, 1
    %v273 = vadd.f32 %v271, %v272
    %v274 = vrot.slane %v267, 4
    %v275 = vadd.f32 %v267, %v274
    %v276 = vrot.slane %v275, 2
    %v277 = vadd.f32 %v275, %v276
    %v278 = vrot.slane %v277, 1
    %v279 = vadd.f32 %v277, %v278
    %v280 = vmul.f32 %v264, %v83
    %v281 = vmul.f32 %v265, %v87
    %v282 = vrot.slane %v280, 4
    %v283 = vadd.f32 %v280, %v282
    %v284 = vrot.slane %v283, 2
    %v285 = vadd.f32 %v283, %v284
    %v286 = vrot.slane %v285, 1
    %v287 = vadd.f32 %v285, %v286
    %v288 = vrot.slane %v281, 4
    %v289 = vadd.f32 %v281, %v288
    %v290 = vrot.slane %v289, 2
    %v291 = vadd.f32 %v289, %v290
    %v292 = vrot.slane %v291, 1
    %v293 = vadd.f32 %v291, %v292
    %v294 = vmul.f32 %v264, %v36
    %v295 = vmul.f32 %v265, %v41
    %v296 = vrot.slane %v294, 4
    %v297 = vadd.f32 %v294, %v296
    %v298 = vrot.slane %v297, 2
    %v299 = vadd.f32 %v297, %v298
    %v300 = vrot.slane %v299, 1
    %v301 = vadd.f32 %v299, %v300
    %v302 = vrot.slane %v295, 4
    %v303 = vadd.f32 %v295, %v302
    %v304 = vrot.slane %v303, 2
    %v305 = vadd.f32 %v303, %v304
    %v306 = vrot.slane %v305, 1
    %v307 = vadd.f32 %v305, %v306
    %v308 = vmul.f32 %v264, %v69
    %v309 = vmul.f32 %v265, %v73
    %v310 = vrot.slane %v308, 4
    %v311 = vadd.f32 %v308, %v310
    %v312 = vrot.slane %v311, 2
    %v313 = vadd.f32 %v311, %v312
    %v314 = vrot.slane %v313, 1
    %v315 = vadd.f32 %v313, %v314
    %v316 = vrot.slane %v309, 4
    %v317 = vadd.f32 %v309, %v316
    %v318 = vrot.slane %v317, 2
    %v319 = vadd.f32 %v317, %v318
    %v320 = vrot.slane %v319, 1
    %v321 = vadd.f32 %v319, %v320
    %v322 = vld [vmem:[%s4] sm:$0xff]
    %v323 = vld [vmem:[%s4 + $0x8] sm:$0xff]
    %324 = vset.pattern.permute.xlu0 0
    %325 = vperm.xlu0 %324, %v322
    %v326 = vpop.permute.xlu0 %325
    %327 = vset.pattern.permute.xlu0 0
    %328 = vperm.xlu0 %327, %v323
    %v329 = vpop.permute.xlu0 %328
    %v330 = vsel %vm260, %v326, 0
    %v331 = vsel %vm261, %v329, 0
    %v332 = vrot.slane %v330, 4
    %v333 = vadd.s32 %v330, %v332
    %v334 = vrot.slane %v333, 2
    %v335 = vadd.s32 %v333, %v334
    %v336 = vrot.slane %v335, 1
    %v337 = vadd.s32 %v335, %v336
    %v338 = vrot.slane %v331, 4
    %v339 = vadd.s32 %v331, %v338
    %v340 = vrot.slane %v339, 2
    %v341 = vadd.s32 %v339, %v340
    %v342 = vrot.slane %v341, 1
    %v343 = vadd.s32 %v341, %v342
    %vm344 = vcmp.lt.f32.partialorder %v256, 0.5
    %vm345 = vcmp.lt.f32.partialorder %v257, 0.5
    %v346 = vadd.s32 %v337, 1
    %v347 = vadd.s32 %v343, 1
    %v348 = vsel %vm344, 0, %v346
    %v349 = vsel %vm345, 0, %v347
    %vm350 = vcmp.gt.s32.totalorder %v348, 0
    %vm351 = vcmp.gt.s32.totalorder %v349, 0
    %v352 = vadd.f32 %v273, %v301
    %v353 = vadd.f32 %v279, %v307
    %v354 = vmul.f32 %v352, 0.5
    %v355 = vmul.f32 %v353, 0.5
    %v356 = vlaneseq
    %v357 = vshrl.u32 %v356, 7
    %v358 = vsub.s32 0, %v357
    %v359 = vrot.slane %v21, %v358
    %v360 = vsub.f32 %v354, %v359
    %v361 = vsub.f32 %v355, %v359
    %v362 = vmul.f32 %v23, 0.1
    %v363 = vlaneseq
    %v364 = vshrl.u32 %v363, 7
    %v365 = vsub.s32 0, %v364
    %v366 = vrot.slane %v362, %v365
    %v367 = vrcp.pop %v366
    %v368 = vmul.f32 %v360, %v367
    %v369 = vmul.f32 %v361, %v367
    %v370 = vadd.f32 %v287, %v315
    %v371 = vadd.f32 %v293, %v321
    %v372 = vmul.f32 %v370, 0.5
    %v373 = vmul.f32 %v371, 0.5
    %v374 = vlaneseq
    %v375 = vshrl.u32 %v374, 7
    %v376 = vsub.s32 0, %v375
    %v377 = vrot.slane %v22, %v376
    %v378 = vsub.f32 %v372, %v377
    %v379 = vsub.f32 %v373, %v377
    %v380 = vmul.f32 %v24, 0.1
    %v381 = vlaneseq
    %v382 = vshrl.u32 %v381, 7
    %v383 = vsub.s32 0, %v382
    %v384 = vrot.slane %v380, %v383
    %v385 = vrcp.pop %v384
    %v386 = vmul.f32 %v378, %v385
    %v387 = vmul.f32 %v379, %v385
    %v388 = vsub.f32 %v301, %v273
    %v389 = vsub.f32 %v307, %v279
    %v390 = vlaneseq
    %v391 = vshrl.u32 %v390, 7
    %v392 = vsub.s32 0, %v391
    %v393 = vrot.slane %v23, %v392
    %v394 = vrcp.pop %v393
    %v395 = vmul.f32 %v388, %v394
    %v396 = vmul.f32 %v389, %v394
    %v397 = vmax.f32 %v395, 1e-12
    %v398 = vmax.f32 %v396, 1e-12
    %v399 = vlog2.pop %v397
    %v400 = vmul.f32 %v399, 0.6931472
    %v401 = vlog2.pop %v398
    %v402 = vmul.f32 %v401, 0.6931472
    %v403 = vmul.f32 %v400, 5.0
    %v404 = vmul.f32 %v402, 5.0
    %v405 = vsub.f32 %v315, %v287
    %v406 = vsub.f32 %v321, %v293
    %v407 = vlaneseq
    %v408 = vshrl.u32 %v407, 7
    %v409 = vsub.s32 0, %v408
    %v410 = vrot.slane %v24, %v409
    %v411 = vrcp.pop %v410
    %v412 = vmul.f32 %v405, %v411
    %v413 = vmul.f32 %v406, %v411
    %v414 = vmax.f32 %v412, 1e-12
    %v415 = vmax.f32 %v413, 1e-12
    %v416 = vlog2.pop %v414
    %v417 = vmul.f32 %v416, 0.6931472
    %v418 = vlog2.pop %v415
    %v419 = vmul.f32 %v418, 0.6931472
    %v420 = vmul.f32 %v417, 5.0
    %v421 = vmul.f32 %v419, 5.0
    %v422 = vld [vmem:[%s0] sm:$0x3]
    %v425 = vrot.slane %v369, 7
    %vm426 = vcmask 1041409
    %v427 = vsel %vm426, %v425, %v368
    %v429 = vsub.f32 %v422, %v427
    %v430 = vand.u32 2147483647, %v429
    %vm431 = vcmp.lt.f32.partialorder %v430, 1.0
    %v432 = vmul.f32 %v430, 0.5
    %v433 = vmul.f32 %v432, %v430
    %v434 = vsub.f32 %v430, 0.5
    %v435 = vsel %vm431, %v433, %v434
    %s436 = scalar_lea.vmem %s0, 2
    %v437 = vld [vmem:[%s436] sm:$0x3]
    %v440 = vrot.slane %v387, 7
    %v441 = vsel %vm426, %v440, %v386
    %v443 = vsub.f32 %v437, %v441
    %v444 = vand.u32 2147483647, %v443
    %vm445 = vcmp.lt.f32.partialorder %v444, 1.0
    %v446 = vmul.f32 %v444, 0.5
    %v447 = vmul.f32 %v446, %v444
    %v448 = vsub.f32 %v444, 0.5
    %v449 = vsel %vm445, %v447, %v448
    %v450 = vadd.f32 %v435, %v449
    %s451 = scalar_lea.vmem %s0, 4
    %v452 = vld [vmem:[%s451] sm:$0x3]
    %v455 = vrot.slane %v404, 7
    %v456 = vsel %vm426, %v455, %v403
    %v458 = vsub.f32 %v452, %v456
    %v459 = vand.u32 2147483647, %v458
    %vm460 = vcmp.lt.f32.partialorder %v459, 1.0
    %v461 = vmul.f32 %v459, 0.5
    %v462 = vmul.f32 %v461, %v459
    %v463 = vsub.f32 %v459, 0.5
    %v464 = vsel %vm460, %v462, %v463
    %v465 = vadd.f32 %v450, %v464
    %s466 = scalar_lea.vmem %s0, 6
    %v467 = vld [vmem:[%s466] sm:$0x3]
    %v470 = vrot.slane %v421, 7
    %v471 = vsel %vm426, %v470, %v420
    %v473 = vsub.f32 %v467, %v471
    %v474 = vand.u32 2147483647, %v473
    %vm475 = vcmp.lt.f32.partialorder %v474, 1.0
    %v476 = vmul.f32 %v474, 0.5
    %v477 = vmul.f32 %v476, %v474
    %v478 = vsub.f32 %v474, 0.5
    %v479 = vsel %vm475, %v477, %v478
    %v480 = vadd.f32 %v465, %v479
    %v482 = vrot.slane %v480, 1
    %v485 = vsel %vm350, %v480, 0.0
    %v486 = vsel %vm351, %v482, 0.0
    %v489 = vrot.slane %v486, 7
    %v490 = vsel %vm426, %v489, %v485
    %vm492 = vcmask 1041408
    %v493 = vsel %vm492, %v490, 0.0
    %494 = vadd.xlane.f32.xlu0 %v493
    %v495 = vpop.xlane.xlu0 %494
    %v496 = vld [vmem:[%s1] sm:$0x3]
    %s497 = scalar_lea.vmem %s1, 2
    %v498 = vld [vmem:[%s497] sm:$0x3]
    %s499 = scalar_lea.vmem %s1, 4
    %v500 = vld [vmem:[%s499] sm:$0x3]
    %s501 = scalar_lea.vmem %s1, 6
    %v502 = vld [vmem:[%s501] sm:$0x3]
    %v503 = vmax.f32 %v496, %v498
    %v504 = vmax.f32 %v503, %v500
    %v505 = vmax.f32 %v504, %v502
    %v506 = vsub.f32 %v496, %v505
    %v507 = vmul.f32 %v506, 1.442695
    %v508 = vpow.pop %v507
    %v509 = vadd.f32 %v508, 0.0
    %vm510 = vcmp.eq.s32.totalorder %v348, 0
    %vm511 = vcmp.eq.s32.totalorder %v349, 0
    %v513 = vrot.slane %v496, 1
    %v516 = vsel %vm510, %v496, 0.0
    %v517 = vsel %vm511, %v513, 0.0
    %v518 = vadd.f32 %v516, 0.0
    %v519 = vadd.f32 %v517, 0.0
    %v520 = vsub.f32 %v498, %v505
    %v521 = vmul.f32 %v520, 1.442695
    %v522 = vpow.pop %v521
    %v523 = vadd.f32 %v509, %v522
    %vm524 = vcmp.eq.s32.totalorder %v348, 1
    %vm525 = vcmp.eq.s32.totalorder %v349, 1
    %v527 = vrot.slane %v498, 1
    %v530 = vsel %vm524, %v498, 0.0
    %v531 = vsel %vm525, %v527, 0.0
    %v532 = vadd.f32 %v518, %v530
    %v533 = vadd.f32 %v519, %v531
    %v534 = vsub.f32 %v500, %v505
    %v535 = vmul.f32 %v534, 1.442695
    %v536 = vpow.pop %v535
    %v537 = vadd.f32 %v523, %v536
    %vm538 = vcmp.eq.s32.totalorder %v348, 2
    %vm539 = vcmp.eq.s32.totalorder %v349, 2
    %v541 = vrot.slane %v500, 1
    %v544 = vsel %vm538, %v500, 0.0
    %v545 = vsel %vm539, %v541, 0.0
    %v546 = vadd.f32 %v532, %v544
    %v547 = vadd.f32 %v533, %v545
    %v548 = vsub.f32 %v502, %v505
    %v549 = vmul.f32 %v548, 1.442695
    %v550 = vpow.pop %v549
    %v551 = vadd.f32 %v537, %v550
    %vm552 = vcmp.eq.s32.totalorder %v348, 3
    %vm553 = vcmp.eq.s32.totalorder %v349, 3
    %v555 = vrot.slane %v502, 1
    %v558 = vsel %vm552, %v502, 0.0
    %v559 = vsel %vm553, %v555, 0.0
    %v560 = vadd.f32 %v546, %v558
    %v561 = vadd.f32 %v547, %v559
    %v562 = vlog2.pop %v551
    %v563 = vmul.f32 %v562, 0.6931472
    %v564 = vadd.f32 %v563, %v505
    %v567 = vrot.slane %v561, 7
    %v568 = vsel %vm426, %v567, %v560
    %v570 = vsub.f32 %v564, %v568
    %v572 = vrot.slane %v570, 1
    %v575 = vsel %vm350, 0.0, %v570
    %v576 = vsel %vm351, 0.0, %v572
    %v577 = vlaneseq
    %v578 = vshrl.u32 %v577, 7
    %v579 = vsub.s32 0, %v578
    %v580 = vrot.slane %v575, %v579
    %582 = vbcast.lane.b32.xlu0 %v580, 256
    %v583 = vpop.permute.xlu0 %582
    %v584 = vlaneseq
    %v585 = vshrl.u32 %v584, 7
    %v586 = vsub.s32 0, %v585
    %v587 = vrot.slane %v576, %v586
    %589 = vbcast.lane.b32.xlu0 %v587, 256
    %v590 = vpop.permute.xlu0 %589
    %vm591 = vcmp.gt.f32.partialorder %v583, %v580
    %vm592 = vcmp.gt.f32.partialorder %v590, %v587
    %vm593 = vcmp.eq.f32.partialorder %v583, %v580
    %vm594 = vcmp.eq.f32.partialorder %v590, %v587
    %vm595 = vcmp.lt.s32.totalorder %v195, %v149
    %v596 = vsel %vm595, 1, 0
    %vm597 = vcmp.eq.s32.totalorder %v596, 1
    %vm598 = vmand %vm593, %vm597
    %vm599 = vmand %vm594, %vm597
    %vm600 = vmor %vm591, %vm598
    %vm601 = vmor %vm592, %vm599
    %v602 = vsel %vm600, 1, 0
    %v603 = vsel %vm601, 1, 0
    %v604 = vrot.slane %v602, 4
    %v605 = vadd.s32 %v602, %v604
    %v606 = vrot.slane %v605, 2
    %v607 = vadd.s32 %v605, %v606
    %v608 = vrot.slane %v607, 1
    %v609 = vadd.s32 %v607, %v608
    %v610 = vrot.slane %v603, 4
    %v611 = vadd.s32 %v603, %v610
    %v612 = vrot.slane %v611, 2
    %v613 = vadd.s32 %v611, %v612
    %v614 = vrot.slane %v613, 1
    %v615 = vadd.s32 %v613, %v614
    %s617 = sor.u32 256, 8
    %618 = vbcast.lane.b32.xlu0 %v580, %s617
    %v619 = vpop.permute.xlu0 %618
    %s621 = sor.u32 256, 8
    %622 = vbcast.lane.b32.xlu0 %v587, %s621
    %v623 = vpop.permute.xlu0 %622
    %v624 = vadd.s32 %v195, 8
    %vm625 = vcmp.gt.f32.partialorder %v619, %v580
    %vm626 = vcmp.gt.f32.partialorder %v623, %v587
    %vm627 = vcmp.eq.f32.partialorder %v619, %v580
    %vm628 = vcmp.eq.f32.partialorder %v623, %v587
    %vm629 = vcmp.lt.s32.totalorder %v624, %v149
    %v630 = vsel %vm629, 1, 0
    %vm631 = vcmp.eq.s32.totalorder %v630, 1
    %vm632 = vmand %vm627, %vm631
    %vm633 = vmand %vm628, %vm631
    %vm634 = vmor %vm625, %vm632
    %vm635 = vmor %vm626, %vm633
    %v636 = vsel %vm634, 1, 0
    %v637 = vsel %vm635, 1, 0
    %v638 = vrot.slane %v636, 4
    %v639 = vadd.s32 %v636, %v638
    %v640 = vrot.slane %v639, 2
    %v641 = vadd.s32 %v639, %v640
    %v642 = vrot.slane %v641, 1
    %v643 = vadd.s32 %v641, %v642
    %v644 = vrot.slane %v637, 4
    %v645 = vadd.s32 %v637, %v644
    %v646 = vrot.slane %v645, 2
    %v647 = vadd.s32 %v645, %v646
    %v648 = vrot.slane %v647, 1
    %v649 = vadd.s32 %v647, %v648
    %v650 = vadd.s32 %v609, %v643
    %v651 = vadd.s32 %v615, %v649
    %s653 = sor.u32 256, 16
    %654 = vbcast.lane.b32.xlu0 %v580, %s653
    %v655 = vpop.permute.xlu0 %654
    %s657 = sor.u32 256, 16
    %658 = vbcast.lane.b32.xlu0 %v587, %s657
    %v659 = vpop.permute.xlu0 %658
    %v660 = vadd.s32 %v195, 16
    %vm661 = vcmp.gt.f32.partialorder %v655, %v580
    %vm662 = vcmp.gt.f32.partialorder %v659, %v587
    %vm663 = vcmp.eq.f32.partialorder %v655, %v580
    %vm664 = vcmp.eq.f32.partialorder %v659, %v587
    %vm665 = vcmp.lt.s32.totalorder %v660, %v149
    %v666 = vsel %vm665, 1, 0
    %vm667 = vcmp.eq.s32.totalorder %v666, 1
    %vm668 = vmand %vm663, %vm667
    %vm669 = vmand %vm664, %vm667
    %vm670 = vmor %vm661, %vm668
    %vm671 = vmor %vm662, %vm669
    %v672 = vsel %vm670, 1, 0
    %v673 = vsel %vm671, 1, 0
    %v674 = vrot.slane %v672, 4
    %v675 = vadd.s32 %v672, %v674
    %v676 = vrot.slane %v675, 2
    %v677 = vadd.s32 %v675, %v676
    %v678 = vrot.slane %v677, 1
    %v679 = vadd.s32 %v677, %v678
    %v680 = vrot.slane %v673, 4
    %v681 = vadd.s32 %v673, %v680
    %v682 = vrot.slane %v681, 2
    %v683 = vadd.s32 %v681, %v682
    %v684 = vrot.slane %v683, 1
    %v685 = vadd.s32 %v683, %v684
    %v686 = vadd.s32 %v650, %v679
    %v687 = vadd.s32 %v651, %v685
    %s689 = sor.u32 256, 24
    %690 = vbcast.lane.b32.xlu0 %v580, %s689
    %v691 = vpop.permute.xlu0 %690
    %s693 = sor.u32 256, 24
    %694 = vbcast.lane.b32.xlu0 %v587, %s693
    %v695 = vpop.permute.xlu0 %694
    %v696 = vadd.s32 %v195, 24
    %vm697 = vcmp.gt.f32.partialorder %v691, %v580
    %vm698 = vcmp.gt.f32.partialorder %v695, %v587
    %vm699 = vcmp.eq.f32.partialorder %v691, %v580
    %vm700 = vcmp.eq.f32.partialorder %v695, %v587
    %vm701 = vcmp.lt.s32.totalorder %v696, %v149
    %v702 = vsel %vm701, 1, 0
    %vm703 = vcmp.eq.s32.totalorder %v702, 1
    %vm704 = vmand %vm699, %vm703
    %vm705 = vmand %vm700, %vm703
    %vm706 = vmor %vm697, %vm704
    %vm707 = vmor %vm698, %vm705
    %v708 = vsel %vm706, 1, 0
    %v709 = vsel %vm707, 1, 0
    %v710 = vrot.slane %v708, 4
    %v711 = vadd.s32 %v708, %v710
    %v712 = vrot.slane %v711, 2
    %v713 = vadd.s32 %v711, %v712
    %v714 = vrot.slane %v713, 1
    %v715 = vadd.s32 %v713, %v714
    %v716 = vrot.slane %v709, 4
    %v717 = vadd.s32 %v709, %v716
    %v718 = vrot.slane %v717, 2
    %v719 = vadd.s32 %v717, %v718
    %v720 = vrot.slane %v719, 1
    %v721 = vadd.s32 %v719, %v720
    %v722 = vadd.s32 %v686, %v715
    %v723 = vadd.s32 %v687, %v721
    %s725 = sor.u32 256, 32
    %726 = vbcast.lane.b32.xlu0 %v580, %s725
    %v727 = vpop.permute.xlu0 %726
    %s729 = sor.u32 256, 32
    %730 = vbcast.lane.b32.xlu0 %v587, %s729
    %v731 = vpop.permute.xlu0 %730
    %v732 = vadd.s32 %v195, 32
    %vm733 = vcmp.gt.f32.partialorder %v727, %v580
    %vm734 = vcmp.gt.f32.partialorder %v731, %v587
    %vm735 = vcmp.eq.f32.partialorder %v727, %v580
    %vm736 = vcmp.eq.f32.partialorder %v731, %v587
    %vm737 = vcmp.lt.s32.totalorder %v732, %v149
    %v738 = vsel %vm737, 1, 0
    %vm739 = vcmp.eq.s32.totalorder %v738, 1
    %vm740 = vmand %vm735, %vm739
    %vm741 = vmand %vm736, %vm739
    %vm742 = vmor %vm733, %vm740
    %vm743 = vmor %vm734, %vm741
    %v744 = vsel %vm742, 1, 0
    %v745 = vsel %vm743, 1, 0
    %v746 = vrot.slane %v744, 4
    %v747 = vadd.s32 %v744, %v746
    %v748 = vrot.slane %v747, 2
    %v749 = vadd.s32 %v747, %v748
    %v750 = vrot.slane %v749, 1
    %v751 = vadd.s32 %v749, %v750
    %v752 = vrot.slane %v745, 4
    %v753 = vadd.s32 %v745, %v752
    %v754 = vrot.slane %v753, 2
    %v755 = vadd.s32 %v753, %v754
    %v756 = vrot.slane %v755, 1
    %v757 = vadd.s32 %v755, %v756
    %v758 = vadd.s32 %v722, %v751
    %v759 = vadd.s32 %v723, %v757
    %s761 = sor.u32 256, 40
    %762 = vbcast.lane.b32.xlu0 %v580, %s761
    %v763 = vpop.permute.xlu0 %762
    %s765 = sor.u32 256, 40
    %766 = vbcast.lane.b32.xlu0 %v587, %s765
    %v767 = vpop.permute.xlu0 %766
    %v768 = vadd.s32 %v195, 40
    %vm769 = vcmp.gt.f32.partialorder %v763, %v580
    %vm770 = vcmp.gt.f32.partialorder %v767, %v587
    %vm771 = vcmp.eq.f32.partialorder %v763, %v580
    %vm772 = vcmp.eq.f32.partialorder %v767, %v587
    %vm773 = vcmp.lt.s32.totalorder %v768, %v149
    %v774 = vsel %vm773, 1, 0
    %vm775 = vcmp.eq.s32.totalorder %v774, 1
    %vm776 = vmand %vm771, %vm775
    %vm777 = vmand %vm772, %vm775
    %vm778 = vmor %vm769, %vm776
    %vm779 = vmor %vm770, %vm777
    %v780 = vsel %vm778, 1, 0
    %v781 = vsel %vm779, 1, 0
    %v782 = vrot.slane %v780, 4
    %v783 = vadd.s32 %v780, %v782
    %v784 = vrot.slane %v783, 2
    %v785 = vadd.s32 %v783, %v784
    %v786 = vrot.slane %v785, 1
    %v787 = vadd.s32 %v785, %v786
    %v788 = vrot.slane %v781, 4
    %v789 = vadd.s32 %v781, %v788
    %v790 = vrot.slane %v789, 2
    %v791 = vadd.s32 %v789, %v790
    %v792 = vrot.slane %v791, 1
    %v793 = vadd.s32 %v791, %v792
    %v794 = vadd.s32 %v758, %v787
    %v795 = vadd.s32 %v759, %v793
    %s797 = sor.u32 256, 48
    %798 = vbcast.lane.b32.xlu0 %v580, %s797
    %v799 = vpop.permute.xlu0 %798
    %s801 = sor.u32 256, 48
    %802 = vbcast.lane.b32.xlu0 %v587, %s801
    %v803 = vpop.permute.xlu0 %802
    %v804 = vadd.s32 %v195, 48
    %vm805 = vcmp.gt.f32.partialorder %v799, %v580
    %vm806 = vcmp.gt.f32.partialorder %v803, %v587
    %vm807 = vcmp.eq.f32.partialorder %v799, %v580
    %vm808 = vcmp.eq.f32.partialorder %v803, %v587
    %vm809 = vcmp.lt.s32.totalorder %v804, %v149
    %v810 = vsel %vm809, 1, 0
    %vm811 = vcmp.eq.s32.totalorder %v810, 1
    %vm812 = vmand %vm807, %vm811
    %vm813 = vmand %vm808, %vm811
    %vm814 = vmor %vm805, %vm812
    %vm815 = vmor %vm806, %vm813
    %v816 = vsel %vm814, 1, 0
    %v817 = vsel %vm815, 1, 0
    %v818 = vrot.slane %v816, 4
    %v819 = vadd.s32 %v816, %v818
    %v820 = vrot.slane %v819, 2
    %v821 = vadd.s32 %v819, %v820
    %v822 = vrot.slane %v821, 1
    %v823 = vadd.s32 %v821, %v822
    %v824 = vrot.slane %v817, 4
    %v825 = vadd.s32 %v817, %v824
    %v826 = vrot.slane %v825, 2
    %v827 = vadd.s32 %v825, %v826
    %v828 = vrot.slane %v827, 1
    %v829 = vadd.s32 %v827, %v828
    %v830 = vadd.s32 %v794, %v823
    %v831 = vadd.s32 %v795, %v829
    %s833 = sor.u32 256, 56
    %834 = vbcast.lane.b32.xlu0 %v580, %s833
    %v835 = vpop.permute.xlu0 %834
    %s837 = sor.u32 256, 56
    %838 = vbcast.lane.b32.xlu0 %v587, %s837
    %v839 = vpop.permute.xlu0 %838
    %v840 = vadd.s32 %v195, 56
    %vm841 = vcmp.gt.f32.partialorder %v835, %v580
    %vm842 = vcmp.gt.f32.partialorder %v839, %v587
    %vm843 = vcmp.eq.f32.partialorder %v835, %v580
    %vm844 = vcmp.eq.f32.partialorder %v839, %v587
    %vm845 = vcmp.lt.s32.totalorder %v840, %v149
    %v846 = vsel %vm845, 1, 0
    %vm847 = vcmp.eq.s32.totalorder %v846, 1
    %vm848 = vmand %vm843, %vm847
    %vm849 = vmand %vm844, %vm847
    %vm850 = vmor %vm841, %vm848
    %vm851 = vmor %vm842, %vm849
    %v852 = vsel %vm850, 1, 0
    %v853 = vsel %vm851, 1, 0
    %v854 = vrot.slane %v852, 4
    %v855 = vadd.s32 %v852, %v854
    %v856 = vrot.slane %v855, 2
    %v857 = vadd.s32 %v855, %v856
    %v858 = vrot.slane %v857, 1
    %v859 = vadd.s32 %v857, %v858
    %v860 = vrot.slane %v853, 4
    %v861 = vadd.s32 %v853, %v860
    %v862 = vrot.slane %v861, 2
    %v863 = vadd.s32 %v861, %v862
    %v864 = vrot.slane %v863, 1
    %v865 = vadd.s32 %v863, %v864
    %v866 = vadd.s32 %v830, %v859
    %v867 = vadd.s32 %v831, %v865
    %s869 = sor.u32 256, 64
    %870 = vbcast.lane.b32.xlu0 %v580, %s869
    %v871 = vpop.permute.xlu0 %870
    %s873 = sor.u32 256, 64
    %874 = vbcast.lane.b32.xlu0 %v587, %s873
    %v875 = vpop.permute.xlu0 %874
    %v876 = vadd.s32 %v195, 64
    %vm877 = vcmp.gt.f32.partialorder %v871, %v580
    %vm878 = vcmp.gt.f32.partialorder %v875, %v587
    %vm879 = vcmp.eq.f32.partialorder %v871, %v580
    %vm880 = vcmp.eq.f32.partialorder %v875, %v587
    %vm881 = vcmp.lt.s32.totalorder %v876, %v149
    %v882 = vsel %vm881, 1, 0
    %vm883 = vcmp.eq.s32.totalorder %v882, 1
    %vm884 = vmand %vm879, %vm883
    %vm885 = vmand %vm880, %vm883
    %vm886 = vmor %vm877, %vm884
    %vm887 = vmor %vm878, %vm885
    %v888 = vsel %vm886, 1, 0
    %v889 = vsel %vm887, 1, 0
    %v890 = vrot.slane %v888, 4
    %v891 = vadd.s32 %v888, %v890
    %v892 = vrot.slane %v891, 2
    %v893 = vadd.s32 %v891, %v892
    %v894 = vrot.slane %v893, 1
    %v895 = vadd.s32 %v893, %v894
    %v896 = vrot.slane %v889, 4
    %v897 = vadd.s32 %v889, %v896
    %v898 = vrot.slane %v897, 2
    %v899 = vadd.s32 %v897, %v898
    %v900 = vrot.slane %v899, 1
    %v901 = vadd.s32 %v899, %v900
    %v902 = vadd.s32 %v866, %v895
    %v903 = vadd.s32 %v867, %v901
    %s905 = sor.u32 256, 72
    %906 = vbcast.lane.b32.xlu0 %v580, %s905
    %v907 = vpop.permute.xlu0 %906
    %s909 = sor.u32 256, 72
    %910 = vbcast.lane.b32.xlu0 %v587, %s909
    %v911 = vpop.permute.xlu0 %910
    %v912 = vadd.s32 %v195, 72
    %vm913 = vcmp.gt.f32.partialorder %v907, %v580
    %vm914 = vcmp.gt.f32.partialorder %v911, %v587
    %vm915 = vcmp.eq.f32.partialorder %v907, %v580
    %vm916 = vcmp.eq.f32.partialorder %v911, %v587
    %vm917 = vcmp.lt.s32.totalorder %v912, %v149
    %v918 = vsel %vm917, 1, 0
    %vm919 = vcmp.eq.s32.totalorder %v918, 1
    %vm920 = vmand %vm915, %vm919
    %vm921 = vmand %vm916, %vm919
    %vm922 = vmor %vm913, %vm920
    %vm923 = vmor %vm914, %vm921
    %v924 = vsel %vm922, 1, 0
    %v925 = vsel %vm923, 1, 0
    %v926 = vrot.slane %v924, 4
    %v927 = vadd.s32 %v924, %v926
    %v928 = vrot.slane %v927, 2
    %v929 = vadd.s32 %v927, %v928
    %v930 = vrot.slane %v929, 1
    %v931 = vadd.s32 %v929, %v930
    %v932 = vrot.slane %v925, 4
    %v933 = vadd.s32 %v925, %v932
    %v934 = vrot.slane %v933, 2
    %v935 = vadd.s32 %v933, %v934
    %v936 = vrot.slane %v935, 1
    %v937 = vadd.s32 %v935, %v936
    %v938 = vadd.s32 %v902, %v931
    %v939 = vadd.s32 %v903, %v937
    %s941 = sor.u32 256, 80
    %942 = vbcast.lane.b32.xlu0 %v580, %s941
    %v943 = vpop.permute.xlu0 %942
    %s945 = sor.u32 256, 80
    %946 = vbcast.lane.b32.xlu0 %v587, %s945
    %v947 = vpop.permute.xlu0 %946
    %v948 = vadd.s32 %v195, 80
    %vm949 = vcmp.gt.f32.partialorder %v943, %v580
    %vm950 = vcmp.gt.f32.partialorder %v947, %v587
    %vm951 = vcmp.eq.f32.partialorder %v943, %v580
    %vm952 = vcmp.eq.f32.partialorder %v947, %v587
    %vm953 = vcmp.lt.s32.totalorder %v948, %v149
    %v954 = vsel %vm953, 1, 0
    %vm955 = vcmp.eq.s32.totalorder %v954, 1
    %vm956 = vmand %vm951, %vm955
    %vm957 = vmand %vm952, %vm955
    %vm958 = vmor %vm949, %vm956
    %vm959 = vmor %vm950, %vm957
    %v960 = vsel %vm958, 1, 0
    %v961 = vsel %vm959, 1, 0
    %v962 = vrot.slane %v960, 4
    %v963 = vadd.s32 %v960, %v962
    %v964 = vrot.slane %v963, 2
    %v965 = vadd.s32 %v963, %v964
    %v966 = vrot.slane %v965, 1
    %v967 = vadd.s32 %v965, %v966
    %v968 = vrot.slane %v961, 4
    %v969 = vadd.s32 %v961, %v968
    %v970 = vrot.slane %v969, 2
    %v971 = vadd.s32 %v969, %v970
    %v972 = vrot.slane %v971, 1
    %v973 = vadd.s32 %v971, %v972
    %v974 = vadd.s32 %v938, %v967
    %v975 = vadd.s32 %v939, %v973
    %s977 = sor.u32 256, 88
    %978 = vbcast.lane.b32.xlu0 %v580, %s977
    %v979 = vpop.permute.xlu0 %978
    %s981 = sor.u32 256, 88
    %982 = vbcast.lane.b32.xlu0 %v587, %s981
    %v983 = vpop.permute.xlu0 %982
    %v984 = vadd.s32 %v195, 88
    %vm985 = vcmp.gt.f32.partialorder %v979, %v580
    %vm986 = vcmp.gt.f32.partialorder %v983, %v587
    %vm987 = vcmp.eq.f32.partialorder %v979, %v580
    %vm988 = vcmp.eq.f32.partialorder %v983, %v587
    %vm989 = vcmp.lt.s32.totalorder %v984, %v149
    %v990 = vsel %vm989, 1, 0
    %vm991 = vcmp.eq.s32.totalorder %v990, 1
    %vm992 = vmand %vm987, %vm991
    %vm993 = vmand %vm988, %vm991
    %vm994 = vmor %vm985, %vm992
    %vm995 = vmor %vm986, %vm993
    %v996 = vsel %vm994, 1, 0
    %v997 = vsel %vm995, 1, 0
    %v998 = vrot.slane %v996, 4
    %v999 = vadd.s32 %v996, %v998
    %v1000 = vrot.slane %v999, 2
    %v1001 = vadd.s32 %v999, %v1000
    %v1002 = vrot.slane %v1001, 1
    %v1003 = vadd.s32 %v1001, %v1002
    %v1004 = vrot.slane %v997, 4
    %v1005 = vadd.s32 %v997, %v1004
    %v1006 = vrot.slane %v1005, 2
    %v1007 = vadd.s32 %v1005, %v1006
    %v1008 = vrot.slane %v1007, 1
    %v1009 = vadd.s32 %v1007, %v1008
    %v1010 = vadd.s32 %v974, %v1003
    %v1011 = vadd.s32 %v975, %v1009
    %s1013 = sor.u32 256, 96
    %1014 = vbcast.lane.b32.xlu0 %v580, %s1013
    %v1015 = vpop.permute.xlu0 %1014
    %s1017 = sor.u32 256, 96
    %1018 = vbcast.lane.b32.xlu0 %v587, %s1017
    %v1019 = vpop.permute.xlu0 %1018
    %v1020 = vadd.s32 %v195, 96
    %vm1021 = vcmp.gt.f32.partialorder %v1015, %v580
    %vm1022 = vcmp.gt.f32.partialorder %v1019, %v587
    %vm1023 = vcmp.eq.f32.partialorder %v1015, %v580
    %vm1024 = vcmp.eq.f32.partialorder %v1019, %v587
    %vm1025 = vcmp.lt.s32.totalorder %v1020, %v149
    %v1026 = vsel %vm1025, 1, 0
    %vm1027 = vcmp.eq.s32.totalorder %v1026, 1
    %vm1028 = vmand %vm1023, %vm1027
    %vm1029 = vmand %vm1024, %vm1027
    %vm1030 = vmor %vm1021, %vm1028
    %vm1031 = vmor %vm1022, %vm1029
    %v1032 = vsel %vm1030, 1, 0
    %v1033 = vsel %vm1031, 1, 0
    %v1034 = vrot.slane %v1032, 4
    %v1035 = vadd.s32 %v1032, %v1034
    %v1036 = vrot.slane %v1035, 2
    %v1037 = vadd.s32 %v1035, %v1036
    %v1038 = vrot.slane %v1037, 1
    %v1039 = vadd.s32 %v1037, %v1038
    %v1040 = vrot.slane %v1033, 4
    %v1041 = vadd.s32 %v1033, %v1040
    %v1042 = vrot.slane %v1041, 2
    %v1043 = vadd.s32 %v1041, %v1042
    %v1044 = vrot.slane %v1043, 1
    %v1045 = vadd.s32 %v1043, %v1044
    %v1046 = vadd.s32 %v1010, %v1039
    %v1047 = vadd.s32 %v1011, %v1045
    %s1049 = sor.u32 256, 104
    %1050 = vbcast.lane.b32.xlu0 %v580, %s1049
    %v1051 = vpop.permute.xlu0 %1050
    %s1053 = sor.u32 256, 104
    %1054 = vbcast.lane.b32.xlu0 %v587, %s1053
    %v1055 = vpop.permute.xlu0 %1054
    %v1056 = vadd.s32 %v195, 104
    %vm1057 = vcmp.gt.f32.partialorder %v1051, %v580
    %vm1058 = vcmp.gt.f32.partialorder %v1055, %v587
    %vm1059 = vcmp.eq.f32.partialorder %v1051, %v580
    %vm1060 = vcmp.eq.f32.partialorder %v1055, %v587
    %vm1061 = vcmp.lt.s32.totalorder %v1056, %v149
    %v1062 = vsel %vm1061, 1, 0
    %vm1063 = vcmp.eq.s32.totalorder %v1062, 1
    %vm1064 = vmand %vm1059, %vm1063
    %vm1065 = vmand %vm1060, %vm1063
    %vm1066 = vmor %vm1057, %vm1064
    %vm1067 = vmor %vm1058, %vm1065
    %v1068 = vsel %vm1066, 1, 0
    %v1069 = vsel %vm1067, 1, 0
    %v1070 = vrot.slane %v1068, 4
    %v1071 = vadd.s32 %v1068, %v1070
    %v1072 = vrot.slane %v1071, 2
    %v1073 = vadd.s32 %v1071, %v1072
    %v1074 = vrot.slane %v1073, 1
    %v1075 = vadd.s32 %v1073, %v1074
    %v1076 = vrot.slane %v1069, 4
    %v1077 = vadd.s32 %v1069, %v1076
    %v1078 = vrot.slane %v1077, 2
    %v1079 = vadd.s32 %v1077, %v1078
    %v1080 = vrot.slane %v1079, 1
    %v1081 = vadd.s32 %v1079, %v1080
    %v1082 = vadd.s32 %v1046, %v1075
    %v1083 = vadd.s32 %v1047, %v1081
    %s1085 = sor.u32 256, 112
    %1086 = vbcast.lane.b32.xlu0 %v580, %s1085
    %v1087 = vpop.permute.xlu0 %1086
    %s1089 = sor.u32 256, 112
    %1090 = vbcast.lane.b32.xlu0 %v587, %s1089
    %v1091 = vpop.permute.xlu0 %1090
    %v1092 = vadd.s32 %v195, 112
    %vm1093 = vcmp.gt.f32.partialorder %v1087, %v580
    %vm1094 = vcmp.gt.f32.partialorder %v1091, %v587
    %vm1095 = vcmp.eq.f32.partialorder %v1087, %v580
    %vm1096 = vcmp.eq.f32.partialorder %v1091, %v587
    %vm1097 = vcmp.lt.s32.totalorder %v1092, %v149
    %v1098 = vsel %vm1097, 1, 0
    %vm1099 = vcmp.eq.s32.totalorder %v1098, 1
    %vm1100 = vmand %vm1095, %vm1099
    %vm1101 = vmand %vm1096, %vm1099
    %vm1102 = vmor %vm1093, %vm1100
    %vm1103 = vmor %vm1094, %vm1101
    %v1104 = vsel %vm1102, 1, 0
    %v1105 = vsel %vm1103, 1, 0
    %v1106 = vrot.slane %v1104, 4
    %v1107 = vadd.s32 %v1104, %v1106
    %v1108 = vrot.slane %v1107, 2
    %v1109 = vadd.s32 %v1107, %v1108
    %v1110 = vrot.slane %v1109, 1
    %v1111 = vadd.s32 %v1109, %v1110
    %v1112 = vrot.slane %v1105, 4
    %v1113 = vadd.s32 %v1105, %v1112
    %v1114 = vrot.slane %v1113, 2
    %v1115 = vadd.s32 %v1113, %v1114
    %v1116 = vrot.slane %v1115, 1
    %v1117 = vadd.s32 %v1115, %v1116
    %v1118 = vadd.s32 %v1082, %v1111
    %v1119 = vadd.s32 %v1083, %v1117
    %s1121 = sor.u32 256, 120
    %1122 = vbcast.lane.b32.xlu0 %v580, %s1121
    %v1123 = vpop.permute.xlu0 %1122
    %s1125 = sor.u32 256, 120
    %1126 = vbcast.lane.b32.xlu0 %v587, %s1125
    %v1127 = vpop.permute.xlu0 %1126
    %v1128 = vadd.s32 %v195, 120
    %vm1129 = vcmp.gt.f32.partialorder %v1123, %v580
    %vm1130 = vcmp.gt.f32.partialorder %v1127, %v587
    %vm1131 = vcmp.eq.f32.partialorder %v1123, %v580
    %vm1132 = vcmp.eq.f32.partialorder %v1127, %v587
    %vm1133 = vcmp.lt.s32.totalorder %v1128, %v149
    %v1134 = vsel %vm1133, 1, 0
    %vm1135 = vcmp.eq.s32.totalorder %v1134, 1
    %vm1136 = vmand %vm1131, %vm1135
    %vm1137 = vmand %vm1132, %vm1135
    %vm1138 = vmor %vm1129, %vm1136
    %vm1139 = vmor %vm1130, %vm1137
    %v1140 = vsel %vm1138, 1, 0
    %v1141 = vsel %vm1139, 1, 0
    %v1142 = vrot.slane %v1140, 4
    %v1143 = vadd.s32 %v1140, %v1142
    %v1144 = vrot.slane %v1143, 2
    %v1145 = vadd.s32 %v1143, %v1144
    %v1146 = vrot.slane %v1145, 1
    %v1147 = vadd.s32 %v1145, %v1146
    %v1148 = vrot.slane %v1141, 4
    %v1149 = vadd.s32 %v1141, %v1148
    %v1150 = vrot.slane %v1149, 2
    %v1151 = vadd.s32 %v1149, %v1150
    %v1152 = vrot.slane %v1151, 1
    %v1153 = vadd.s32 %v1151, %v1152
    %v1154 = vadd.s32 %v1118, %v1147
    %v1155 = vadd.s32 %v1119, %v1153
    %v1156 = vsel %vm350, 1, 0
    %v1157 = vsel %vm351, 1, 0
    %v1158 = vsel %vm426, %v1157, %v1156
    %v1159 = vsel %vm492, %v1158, 0
    %v1160 = vand.u32 %v1159, 65535
    %v1161 = vshrl.u32 %v1159, 16
    %v1162 = vcvt.s32.f32 %v1160
    %v1163 = vcvt.s32.f32 %v1161
    %1164 = vadd.xlane.f32.xlu0 %v1162
    %v1165 = vpop.xlane.xlu0 %1164
    %1166 = vadd.xlane.f32.xlu0 %v1163
    %v1167 = vpop.xlane.xlu0 %1166
    %v1168 = vcvt.f32.s32 %v1165
    %v1169 = vcvt.f32.s32 %v1167
    %v1170 = vshll.u32 %v1169, 16
    %v1171 = vadd.s32 %v1170, %v1168
    %v1172 = vmul.u32 %v1171, 3
    %vm1173 = vcmp.lt.s32.totalorder %v1172, 127
    %v1174 = vsel %vm1173, %v1172, 127
    %v1175 = vrot.slane %v1174, 1
    %vm1176 = vcmp.lt.s32.totalorder %v1154, %v1174
    %vm1177 = vcmp.lt.s32.totalorder %v1155, %v1175
    %vm1178 = vmor %vm350, %vm1176
    %vm1179 = vmor %vm351, %vm1177
    %v1180 = vsel %vm1178, %v570, 0.0
    %v1181 = vsel %vm1179, %v572, 0.0
    %v1184 = vrot.slane %v1181, 7
    %v1185 = vsel %vm426, %v1184, %v1180
    %v1187 = vsel %vm492, %v1185, 0.0
    %1188 = vadd.xlane.f32.xlu0 %v1187
    %v1189 = vpop.xlane.xlu0 %1188
    %s1190 = smul.u32 0, 2
    %v1191 = vstv %s1190
    %v1192 = vadd.s32 %v1191, %v195
    %vm1193 = vcmp.lt.s32.totalorder %v1192, 2
    %v1194 = vsel %vm1193, %v495, 0.0
    %v1195 = vsel %vm1193, %v1189, 0.0
    %v1196 = vcvt.s32.f32 %v1171
    %v1197 = vsel %vm1193, %v1196, 0.0
    %vm1198 = vcmp.eq.s32.totalorder %v149, 0
    %v1200 = vlaneseq
    %v1201 = vshrl.u32 %v1200, 7
    %v1202 = vsub.s32 0, %v1201
    %v1203 = vrot.slane %v1194, %v1202
    %v1204 = vlaneseq
    %v1205 = vshrl.u32 %v1204, 7
    %v1206 = vsub.s32 1, %v1205
    %v1207 = vrot.slane %v1194, %v1206
    %vm1210 = vcmp.eq.s32.totalorder %v149, 1
    %v1212 = vlaneseq
    %v1213 = vshrl.u32 %v1212, 7
    %v1214 = vsub.s32 0, %v1213
    %v1215 = vrot.slane %v1195, %v1214
    %v1216 = vlaneseq
    %v1217 = vshrl.u32 %v1216, 7
    %v1218 = vsub.s32 1, %v1217
    %v1219 = vrot.slane %v1195, %v1218
    %vm1222 = vcmp.eq.s32.totalorder %v149, 2
    %v1224 = vlaneseq
    %v1225 = vshrl.u32 %v1224, 7
    %v1226 = vsub.s32 0, %v1225
    %v1227 = vrot.slane %v1197, %v1226
    %v1228 = vlaneseq
    %v1229 = vshrl.u32 %v1228, 7
    %v1230 = vsub.s32 1, %v1229
    %v1231 = vrot.slane %v1197, %v1230
    %v1234 = vsel %vm1222, 1, 0
    %vm1235 = vcmp.eq.s32.totalorder %v1234, 1
    %v1236 = vsel %vm1235, %v1227, 0.0
    %v1237 = vsel %vm1235, %v1231, 0.0
    %v1238 = vsel %vm1210, 1, 0
    %vm1239 = vcmp.eq.s32.totalorder %v1238, 1
    %v1240 = vsel %vm1239, %v1215, %v1236
    %v1241 = vsel %vm1239, %v1219, %v1237
    %v1242 = vsel %vm1198, 1, 0
    %vm1243 = vcmp.eq.s32.totalorder %v1242, 1
    %v1244 = vsel %vm1243, %v1203, %v1240
    %v1245 = vsel %vm1243, %v1207, %v1241
    %1246 = vst [vmem:[#allocation2] sm:$0x1] %v1244
    %1247 = vst [vmem:[#allocation2 + $0x1] sm:$0x1] %v1245
    // Predicated region
    $region22: #{tpu_custom_call.1} parent=1 // pred_check
      _
    $region23: #{tpu_custom_call.1} parent=1 // pred_check_branch
      %1249 = sbr.rel (0) target = $region25
    $region24: #{tpu_custom_call.1} parent=1 // pred_region
      %s1251 = ssub.s32 32, 32
      %1252 = vsyncadd [#allocation3], %s1251
      %s1253 = sshll.u32 [#allocation2], 4
      %s1254 = int_to_ptr.vmem [resolvable:$true] %s1253
      %1259 = dma.vmem_to_hbm [thread:$0]  %s1254, 32, %s5, [#allocation3], 16, 16, 1
    $region25: #{tpu_custom_call.1} parent=1 // pred_fallthru
      _
    // Predicated region
    $region26: #{tpu_custom_call.1} parent=1 // pred_check
      _
    $region27: #{tpu_custom_call.1} parent=1 // pred_check_branch
      %1261 = sbr.rel (0) target = $region29
    $region28: #{tpu_custom_call.1} parent=1 // pred_region
      %1262 = dma.done [#allocation3], 32
    $region29: #{tpu_custom_call.1} parent=1 // pred_fallthru
      _
    %1263 = vsyncpa [#allocation3], 1

</llo_original>
